<compile_context>
chip_gen: v5e
topology: v5e:2x2
jax: 0.10.0
libtpu: 0.0.40
codegen_flags: <defaults>
</compile_context>

<pallas_src>
import functools
import math

import jax
import jax.numpy as jnp
import numpy as np
from jax.experimental import pallas as pl
from jax.experimental.pallas import tpu as pltpu


# ------------------------------ fused kernel -------------------------------

def fused_user_encoder_kernel(
    x_ref,
    q_wT_ref, q_b_ref, k_wT_ref, k_b_ref, v_wT_ref, v_b_ref,
    red_ref, redT_ref, out_wT_ref, out_b_ref,
    a1f_wT_ref, a1f_b_ref, a1_q_ref,
    wih_r_ref, wih_z_ref, wih_n_ref,
    whh_r_ref, whh_z_ref, whh_n_ref,
    b_r_ref, b_z_ref, bih_n_ref, bhh_n_ref,
    a2_wT_ref, a2_b_ref, a2_q_ref,
    user_ref,
    *, num_recent_news,
):
    f32 = jnp.float32
    B, H, D = x_ref.shape
    G = whh_r_ref.shape[0]
    Q = a1f_wT_ref.shape[1]
    R = num_recent_news

    x = x_ref[...]                                   # (B, H, D)
    xf = x.reshape(B * H, D)

    # ---- MHA projections (q columns pre-scaled by 1/sqrt(head_dim)) --------
    q3 = (jnp.dot(xf, q_wT_ref[...], preferred_element_type=f32)
          + q_b_ref[...]).reshape(B, H, D)
    k3 = (jnp.dot(xf, k_wT_ref[...], preferred_element_type=f32)
          + k_b_ref[...]).reshape(B, H, D)
    v3 = (jnp.dot(xf, v_wT_ref[...], preferred_element_type=f32)
          + v_b_ref[...]).reshape(B, H, D)

    red = red_ref[...]                               # (D, nh)  head-sum
    redT = redT_ref[...]                             # (nh, D)  head-broadcast

    # torch batch_first=False semantics: softmax over the *batch* axis for
    # every (history position, head).  Per key row bk, scores for all
    # (bq, h, n):  (q3 * k3[bk]) @ red  -- leading-axis broadcast, no copies.
    s_chunks = [
        jnp.dot((q3 * k3[bk][None, :, :]).reshape(B * H, D), red,
                preferred_element_type=f32)
        for bk in range(B)
    ]                                                # each (B*H, nh)
    m = s_chunks[0]
    for bk in range(1, B):
        m = jnp.maximum(m, s_chunks[bk])
    e_chunks = [jnp.exp(s - m) for s in s_chunks]
    denom = e_chunks[0]
    for bk in range(1, B):
        denom = denom + e_chunks[bk]
    inv = pl.reciprocal(denom, approx=True)          # EUP slot

    def weighted_v(bk):
        w_full = jnp.dot(e_chunks[bk] * inv, redT,
                         preferred_element_type=f32).reshape(B, H, D)
        return w_full * v3[bk][None, :, :]

    attn3 = weighted_v(0)
    for bk in range(1, B):
        attn3 = attn3 + weighted_v(bk)               # (B, H, D)
    attn = attn3.reshape(B * H, D)
    # dropout after out_proj: eval-mode identity

    # ---- AdditiveAttention #1 (out_proj folded into a1 weights host-side) --
    proj1 = jnp.tanh(jnp.dot(attn, a1f_wT_ref[...], preferred_element_type=f32)
                     + a1f_b_ref[...])               # (B*H, Q)
    sc1 = jnp.sum(proj1.reshape(B, H, Q) * a1_q_ref[...].reshape(1, 1, Q),
                  axis=-1)                           # (B, H)
    sc1 = sc1 - jnp.max(sc1, axis=-1, keepdims=True)
    w1 = jnp.exp(sc1)
    w1 = w1 / jnp.sum(w1, axis=-1, keepdims=True)    # exact: sum(w1) == 1
    weighted_attn = jnp.sum(w1[:, :, None] * attn3, axis=1)          # (B, D)
    # out_proj applied once to the weighted sum (linearity + sum(w1)=1).
    longterm = (jnp.dot(weighted_attn, out_wT_ref[...],
                        preferred_element_type=f32) + out_b_ref[...])  # (B, D)
    # TODO(synk): for large B*H, replace the sublane-reduction weighted sums
    # with block-diagonal MXU matmuls (same selection-matrix trick as red/redT).

    # ---- GRU over recent news: per-gate weights, input proj hoisted --------
    recent = x_ref[:, pl.ds(H - R, R), :].reshape(B * R, D)   # vld from VMEM
    gi_r = jnp.dot(recent, wih_r_ref[...],
                   preferred_element_type=f32).reshape(B, R, G)
    gi_z = jnp.dot(recent, wih_z_ref[...],
                   preferred_element_type=f32).reshape(B, R, G)
    gi_n = (jnp.dot(recent, wih_n_ref[...], preferred_element_type=f32)
            + bih_n_ref[...]).reshape(B, R, G)

    # step 0: h0 == 0, so the recurrent matmuls vanish.
    r = jax.nn.sigmoid(gi_r[:, 0, :] + b_r_ref[...])
    z = jax.nn.sigmoid(gi_z[:, 0, :] + b_z_ref[...])
    n = jnp.tanh(gi_n[:, 0, :] + r * bhh_n_ref[...])
    h = (1.0 - z) * n
    for t in range(1, R):                            # R is small & static
        gh_r = jnp.dot(h, whh_r_ref[...], preferred_element_type=f32)
        gh_z = jnp.dot(h, whh_z_ref[...], preferred_element_type=f32)
        gh_n = (jnp.dot(h, whh_n_ref[...], preferred_element_type=f32)
                + bhh_n_ref[...])
        r = jax.nn.sigmoid(gi_r[:, t, :] + gh_r + b_r_ref[...])
        z = jax.nn.sigmoid(gi_z[:, t, :] + gh_z + b_z_ref[...])
        n = jnp.tanh(gi_n[:, t, :] + r * gh_n)
        h = (1.0 - z) * n + z * h                    # (B, G)

    # ---- final AdditiveAttention over {short, long}: no concat, exact mix --
    proj_s = jnp.tanh(jnp.dot(h, a2_wT_ref[...], preferred_element_type=f32)
                      + a2_b_ref[...])
    proj_l = jnp.tanh(jnp.dot(longterm, a2_wT_ref[...],
                              preferred_element_type=f32) + a2_b_ref[...])
    s_s = jnp.sum(proj_s * a2_q_ref[...], axis=-1, keepdims=True)    # (B, 1)
    s_l = jnp.sum(proj_l * a2_q_ref[...], axis=-1, keepdims=True)
    mx = jnp.maximum(s_s, s_l)
    e_s = jnp.exp(s_s - mx)
    e_l = jnp.exp(s_l - mx)
    user_ref[...] = (e_s * h + e_l * longterm) / (e_s + e_l)


# ------------------------------ wrapper -------------------------------------

_PARAM_ORDER = (
    "q_wT", "q_b", "k_wT", "k_b", "v_wT", "v_b",
    "red", "redT", "out_wT", "out_b",
    "a1f_wT", "a1f_b", "a1_q",
    "wih_r", "wih_z", "wih_n", "whh_r", "whh_z", "whh_n",
    "b_r", "b_z", "bih_n", "bhh_n",
    "a2_wT", "a2_b", "a2_q",
)


def user_encoder_forward(x, kp, *, num_recent_news):
    """Whole forward pass as a single pallas_call (all operands VMEM-resident).

    TODO(synk): for large serving batches, add a grid over the *query* batch
    with dimension_semantics=("parallel",) (2 TCs on v7x); K/V must stay whole
    because the MHA softmax couples all users along the batch axis, and the
    block size must be re-derived for v7x's 64 MiB VMEM.
    """
    B = x.shape[0]
    G = kp["whh_r"].shape[0]
    args = (x,) + tuple(kp[k] for k in _PARAM_ORDER)
    vmem = pl.BlockSpec(memory_space=pltpu.MemorySpace.VMEM)
    kernel = functools.partial(fused_user_encoder_kernel,
                               num_recent_news=num_recent_news)
    return pl.pallas_call(
        kernel,
        out_shape=jax.ShapeDtypeStruct((B, G), jnp.float32),
        in_specs=[vmem] * len(args),
        out_specs=vmem,
    )(*args)


def prepare_params(p, *, num_heads):
    """One-time host-side transform of PyTorch-layout params into kernel layout.

    Splits q/k/v and per-gate GRU weights (lane-0 aligned, no in-kernel lane
    slicing), folds 1/sqrt(head_dim) into q, folds out_proj into additive
    attention #1, pre-adds the r/z gate biases, and precomputes the head-sum /
    head-broadcast selection matrices.  Accepts numpy or JAX arrays.
    """
    as_f32 = lambda a: jnp.asarray(a, jnp.float32)
    in_wT = as_f32(p["in_proj_wT"])                    # (D, 3D)
    D = in_wT.shape[0]
    hd = D // num_heads
    scale = 1.0 / math.sqrt(hd)
    in_b = as_f32(p["in_proj_b"]).reshape(1, 3 * D)
    out_wT = as_f32(p["out_proj_wT"])                  # (D, D)
    out_b = as_f32(p["out_proj_b"]).reshape(1, D)
    a1_wT = as_f32(p["add1_wT"])
    a1_b = as_f32(p["add1_b"])
    wihT = as_f32(p["wihT"])                           # (D, 3G)  gates r,z,n
    whhT = as_f32(p["whhT"])                           # (G, 3G)
    G = whhT.shape[0]
    bih = as_f32(p["bih"]).reshape(1, 3 * G)
    bhh = as_f32(p["bhh"]).reshape(1, 3 * G)

    d_i = np.arange(D)[:, None]
    n_i = np.arange(num_heads)[None, :]
    red_np = ((d_i >= n_i * hd) & (d_i < (n_i + 1) * hd)).astype(np.float32)

    return dict(
        q_wT=in_wT[:, :D] * scale, q_b=in_b[:, :D] * scale,
        k_wT=in_wT[:, D:2 * D], k_b=in_b[:, D:2 * D],
        v_wT=in_wT[:, 2 * D:], v_b=in_b[:, 2 * D:],
        red=jnp.asarray(red_np), redT=jnp.asarray(np.ascontiguousarray(red_np.T)),
        out_wT=out_wT, out_b=out_b,
        a1f_wT=out_wT @ a1_wT, a1f_b=out_b @ a1_wT + a1_b,
        a1_q=as_f32(p["add1_q"]),
        wih_r=wihT[:, :G], wih_z=wihT[:, G:2 * G], wih_n=wihT[:, 2 * G:],
        whh_r=whhT[:, :G], whh_z=whhT[:, G:2 * G], whh_n=whhT[:, 2 * G:],
        b_r=bih[:, :G] + bhh[:, :G],
        b_z=bih[:, G:2 * G] + bhh[:, G:2 * G],
        bih_n=bih[:, 2 * G:], bhh_n=bhh[:, 2 * G:],
        a2_wT=as_f32(p["add2_wT"]), a2_b=as_f32(p["add2_b"]),
        a2_q=as_f32(p["add2_q"]),
    )


# ------------------------- plain-JAX reference -------------------------------

def reference_forward(x, p, *, num_heads, num_recent_news):
    B, H, D = x.shape
    hd = D // num_heads
    xf = x.reshape(B * H, D)
    qkv = xf @ p["in_proj_wT"] + p["in_proj_b"]
    q, k, v = qkv[:, :D], qkv[:, D:2 * D], qkv[:, 2 * D:]

    def to_heads(t):
        return (t.reshape(B, H, num_heads, hd)
                 .transpose(1, 2, 0, 3)
                 .reshape(H * num_heads, B, hd))

    qh, kh, vh = to_heads(q), to_heads(k), to_heads(v)
    s = jnp.einsum("bld,bmd->blm", qh, kh) / math.sqrt(hd)
    pw = jax.nn.softmax(s, axis=-1)
    attn = jnp.einsum("blm,bmd->bld", pw, vh)
    attn = attn.reshape(H, num_heads, B, hd).transpose(2, 0, 1, 3).reshape(B * H, D)
    mha_out = (attn @ p["out_proj_wT"] + p["out_proj_b"]).reshape(B, H, D)

    def additive(x3, wT, b, qv):
        proj = jnp.tanh(x3 @ wT + b)
        scores = jnp.sum(proj * qv.reshape(1, 1, -1), axis=-1)
        w = jax.nn.softmax(scores, axis=1)
        return jnp.sum(w[:, :, None] * x3, axis=1)

    longterm = additive(mha_out, p["add1_wT"], p["add1_b"], p["add1_q"])
    recent = x[:, -num_recent_news:, :]
    G = p["whhT"].shape[0]
    h = jnp.zeros((B, G), jnp.float32)
    for t in range(num_recent_news):
        x_t = recent[:, t, :]
        gi = x_t @ p["wihT"] + p["bih"]
        gh = h @ p["whhT"] + p["bhh"]
        r = jax.nn.sigmoid(gi[:, :G] + gh[:, :G])
        z = jax.nn.sigmoid(gi[:, G:2 * G] + gh[:, G:2 * G])
        n = jnp.tanh(gi[:, 2 * G:] + r * gh[:, 2 * G:])
        h = (1.0 - z) * n + z * h
    stacked = jnp.stack([h, longterm], axis=1)
    return additive(stacked, p["add2_wT"], p["add2_b"], p["add2_q"])


# --------------------------------- main --------------------------------------

def init_params(key, D, Q, G):
    ks = jax.random.split(key, 14)
    u = lambda k, shape: jax.random.uniform(k, shape, jnp.float32, -0.1, 0.1)
    return dict(
        in_proj_wT=u(ks[0], (D, 3 * D)),   # MultiheadAttention in_proj_weight.T
        in_proj_b=u(ks[1], (1, 3 * D)),
        out_proj_wT=u(ks[2], (D, D)),      # out_proj weight.T
        out_proj_b=u(ks[3], (1, D)),
        add1_wT=u(ks[4], (D, Q)),          # AdditiveAttention #1
        add1_b=u(ks[5], (1, Q)),
        add1_q=u(ks[6], (1, Q)),
        wihT=u(ks[7], (D, 3 * G)),         # GRU weight_ih_l0.T (gates r,z,n)
        whhT=u(ks[8], (G, 3 * G)),         # GRU weight_hh_l0.T
        bih=u(ks[9], (1, 3 * G)),
        bhh=u(ks[10], (1, 3 * G)),
        add2_wT=u(ks[11], (G, Q)),         # final AdditiveAttention
        add2_b=u(ks[12], (1, Q)),
        add2_q=u(ks[13], (1, Q)),
    )


if __name__ == "__main__":
    # Module hyper-parameters (gru_hidden_dim must equal num_filters for
    # torch.stack([shortterm, longterm], dim=1) to be valid, as in CenNewsRec).
    num_filters = 32        # D
    num_heads = 4
    query_dim = 16          # Q
    gru_hidden_dim = 32     # G == D
    num_recent_news = 4
    dropout_probability = 0.2  # eval-mode identity

    B, H = 2, 8             # batch, history length

    key = jax.random.PRNGKey(0)
    k_x, k_p = jax.random.split(key)
    hist_news_vector = jax.random.normal(k_x, (B, H, num_filters), jnp.float32)
    params = init_params(k_p, num_filters, query_dim, gru_hidden_dim)
    kernel_params = prepare_params(params, num_heads=num_heads)  # host-side, once

    fwd = jax.jit(functools.partial(user_encoder_forward,
                                    num_recent_news=num_recent_news))
    out = jax.block_until_ready(fwd(hist_news_vector, kernel_params))

    ref = jax.block_until_ready(
        reference_forward(hist_news_vector, params,
                          num_heads=num_heads,
                          num_recent_news=num_recent_news))

    assert out.shape == (B, gru_hidden_dim), out.shape
    # Tolerance accounts for the EUP approximate reciprocal used in the MHA
    # batch-axis softmax; all other normalizations are exact float32.
    assert np.allclose(np.asarray(out), np.asarray(ref), rtol=2e-2, atol=2e-3), (
        float(np.max(np.abs(np.asarray(out) - np.asarray(ref)))))

    print("KERNEL_OK")
</pallas_src>

<mosaic_0001>
module attributes {stable_mosaic.version = 11 : i64} {
  func.func @fused_user_encoder_kernel(%arg0: memref<2x8x32xf32, #tpu.memory_space<vmem>>, %arg1: memref<32x32xf32, #tpu.memory_space<vmem>>, %arg2: memref<1x32xf32, #tpu.memory_space<vmem>>, %arg3: memref<32x32xf32, #tpu.memory_space<vmem>>, %arg4: memref<1x32xf32, #tpu.memory_space<vmem>>, %arg5: memref<32x32xf32, #tpu.memory_space<vmem>>, %arg6: memref<1x32xf32, #tpu.memory_space<vmem>>, %arg7: memref<32x4xf32, #tpu.memory_space<vmem>>, %arg8: memref<4x32xf32, #tpu.memory_space<vmem>>, %arg9: memref<32x32xf32, #tpu.memory_space<vmem>>, %arg10: memref<1x32xf32, #tpu.memory_space<vmem>>, %arg11: memref<32x16xf32, #tpu.memory_space<vmem>>, %arg12: memref<1x16xf32, #tpu.memory_space<vmem>>, %arg13: memref<1x16xf32, #tpu.memory_space<vmem>>, %arg14: memref<32x32xf32, #tpu.memory_space<vmem>>, %arg15: memref<32x32xf32, #tpu.memory_space<vmem>>, %arg16: memref<32x32xf32, #tpu.memory_space<vmem>>, %arg17: memref<32x32xf32, #tpu.memory_space<vmem>>, %arg18: memref<32x32xf32, #tpu.memory_space<vmem>>, %arg19: memref<32x32xf32, #tpu.memory_space<vmem>>, %arg20: memref<1x32xf32, #tpu.memory_space<vmem>>, %arg21: memref<1x32xf32, #tpu.memory_space<vmem>>, %arg22: memref<1x32xf32, #tpu.memory_space<vmem>>, %arg23: memref<1x32xf32, #tpu.memory_space<vmem>>, %arg24: memref<32x16xf32, #tpu.memory_space<vmem>>, %arg25: memref<1x16xf32, #tpu.memory_space<vmem>>, %arg26: memref<1x16xf32, #tpu.memory_space<vmem>>, %arg27: memref<2x32xf32, #tpu.memory_space<vmem>>) attributes {dimension_semantics = [], scalar_prefetch = 0 : i64, scratch_operands = 0 : i64, tpu.core_type = #tpu.core_type<tc>} {
    %c0 = arith.constant 0 : index
    %c0_0 = arith.constant 0 : index
    %c0_1 = arith.constant 0 : index
    %0 = vector.load %arg0[%c0, %c0_0, %c0_1] : memref<2x8x32xf32, #tpu.memory_space<vmem>>, vector<2x8x32xf32>
    %1 = vector.shape_cast %0 : vector<2x8x32xf32> to vector<16x32xf32>
    %c0_2 = arith.constant 0 : index
    %c0_3 = arith.constant 0 : index
    %2 = vector.load %arg1[%c0_2, %c0_3] : memref<32x32xf32, #tpu.memory_space<vmem>>, vector<32x32xf32>
    %cst = arith.constant dense<0.000000e+00> : vector<16x32xf32>
    %3 = tpu.matmul %1, %2, %cst {dimension_numbers = #tpu.dot_dimension_numbers<[1], [0], [0], [1], [0, 0, 1, 1], [], []>} : vector<16x32xf32>, vector<32x32xf32>, vector<16x32xf32> -> vector<16x32xf32>
    %c0_4 = arith.constant 0 : index
    %c0_5 = arith.constant 0 : index
    %4 = vector.load %arg2[%c0_4, %c0_5] : memref<1x32xf32, #tpu.memory_space<vmem>>, vector<1x32xf32>
    %5 = vector.broadcast %4 : vector<1x32xf32> to vector<16x32xf32>
    %6 = arith.addf %3, %5 : vector<16x32xf32>
    %7 = vector.shape_cast %6 : vector<16x32xf32> to vector<2x8x32xf32>
    %c0_6 = arith.constant 0 : index
    %c0_7 = arith.constant 0 : index
    %8 = vector.load %arg3[%c0_6, %c0_7] : memref<32x32xf32, #tpu.memory_space<vmem>>, vector<32x32xf32>
    %cst_8 = arith.constant dense<0.000000e+00> : vector<16x32xf32>
    %9 = tpu.matmul %1, %8, %cst_8 {dimension_numbers = #tpu.dot_dimension_numbers<[1], [0], [0], [1], [0, 0, 1, 1], [], []>} : vector<16x32xf32>, vector<32x32xf32>, vector<16x32xf32> -> vector<16x32xf32>
    %c0_9 = arith.constant 0 : index
    %c0_10 = arith.constant 0 : index
    %10 = vector.load %arg4[%c0_9, %c0_10] : memref<1x32xf32, #tpu.memory_space<vmem>>, vector<1x32xf32>
    %11 = vector.broadcast %10 : vector<1x32xf32> to vector<16x32xf32>
    %12 = arith.addf %9, %11 : vector<16x32xf32>
    %13 = vector.shape_cast %12 : vector<16x32xf32> to vector<2x8x32xf32>
    %c0_11 = arith.constant 0 : index
    %c0_12 = arith.constant 0 : index
    %14 = vector.load %arg5[%c0_11, %c0_12] : memref<32x32xf32, #tpu.memory_space<vmem>>, vector<32x32xf32>
    %cst_13 = arith.constant dense<0.000000e+00> : vector<16x32xf32>
    %15 = tpu.matmul %1, %14, %cst_13 {dimension_numbers = #tpu.dot_dimension_numbers<[1], [0], [0], [1], [0, 0, 1, 1], [], []>} : vector<16x32xf32>, vector<32x32xf32>, vector<16x32xf32> -> vector<16x32xf32>
    %c0_14 = arith.constant 0 : index
    %c0_15 = arith.constant 0 : index
    %16 = vector.load %arg6[%c0_14, %c0_15] : memref<1x32xf32, #tpu.memory_space<vmem>>, vector<1x32xf32>
    %17 = vector.broadcast %16 : vector<1x32xf32> to vector<16x32xf32>
    %18 = arith.addf %15, %17 : vector<16x32xf32>
    %19 = vector.shape_cast %18 : vector<16x32xf32> to vector<2x8x32xf32>
    %c0_16 = arith.constant 0 : index
    %c0_17 = arith.constant 0 : index
    %20 = vector.load %arg7[%c0_16, %c0_17] : memref<32x4xf32, #tpu.memory_space<vmem>>, vector<32x4xf32>
    %c0_18 = arith.constant 0 : index
    %c0_19 = arith.constant 0 : index
    %21 = vector.load %arg8[%c0_18, %c0_19] : memref<4x32xf32, #tpu.memory_space<vmem>>, vector<4x32xf32>
    %22 = vector.extract_strided_slice %13 {offsets = [0, 0, 0], sizes = [1, 8, 32], strides = [1, 1, 1]} : vector<2x8x32xf32> to vector<1x8x32xf32>
    %23 = vector.shape_cast %22 : vector<1x8x32xf32> to vector<8x32xf32>
    %24 = vector.shape_cast %23 : vector<8x32xf32> to vector<1x8x32xf32>
    %25 = vector.broadcast %24 : vector<1x8x32xf32> to vector<2x8x32xf32>
    %26 = arith.mulf %7, %25 : vector<2x8x32xf32>
    %27 = vector.shape_cast %26 : vector<2x8x32xf32> to vector<16x32xf32>
    %cst_20 = arith.constant dense<0.000000e+00> : vector<16x4xf32>
    %28 = tpu.matmul %27, %20, %cst_20 {dimension_numbers = #tpu.dot_dimension_numbers<[1], [0], [0], [1], [0, 0, 1, 1], [], []>} : vector<16x32xf32>, vector<32x4xf32>, vector<16x4xf32> -> vector<16x4xf32>
    %29 = vector.extract_strided_slice %13 {offsets = [1, 0, 0], sizes = [1, 8, 32], strides = [1, 1, 1]} : vector<2x8x32xf32> to vector<1x8x32xf32>
    %30 = vector.shape_cast %29 : vector<1x8x32xf32> to vector<8x32xf32>
    %31 = vector.shape_cast %30 : vector<8x32xf32> to vector<1x8x32xf32>
    %32 = vector.broadcast %31 : vector<1x8x32xf32> to vector<2x8x32xf32>
    %33 = arith.mulf %7, %32 : vector<2x8x32xf32>
    %34 = vector.shape_cast %33 : vector<2x8x32xf32> to vector<16x32xf32>
    %cst_21 = arith.constant dense<0.000000e+00> : vector<16x4xf32>
    %35 = tpu.matmul %34, %20, %cst_21 {dimension_numbers = #tpu.dot_dimension_numbers<[1], [0], [0], [1], [0, 0, 1, 1], [], []>} : vector<16x32xf32>, vector<32x4xf32>, vector<16x4xf32> -> vector<16x4xf32>
    %36 = arith.maximumf %28, %35 : vector<16x4xf32>
    %37 = arith.subf %28, %36 : vector<16x4xf32>
    %38 = math.exp %37 : vector<16x4xf32>
    %39 = arith.subf %35, %36 : vector<16x4xf32>
    %40 = math.exp %39 : vector<16x4xf32>
    %41 = arith.addf %38, %40 : vector<16x4xf32>
    %42 = tpu.reciprocal %41 {approx = true} : vector<16x4xf32> -> vector<16x4xf32>
    %43 = arith.mulf %38, %42 : vector<16x4xf32>
    %cst_22 = arith.constant dense<0.000000e+00> : vector<16x32xf32>
    %44 = tpu.matmul %43, %21, %cst_22 {dimension_numbers = #tpu.dot_dimension_numbers<[1], [0], [0], [1], [0, 0, 1, 1], [], []>} : vector<16x4xf32>, vector<4x32xf32>, vector<16x32xf32> -> vector<16x32xf32>
    %45 = vector.shape_cast %44 : vector<16x32xf32> to vector<2x8x32xf32>
    %46 = vector.extract_strided_slice %19 {offsets = [0, 0, 0], sizes = [1, 8, 32], strides = [1, 1, 1]} : vector<2x8x32xf32> to vector<1x8x32xf32>
    %47 = vector.shape_cast %46 : vector<1x8x32xf32> to vector<8x32xf32>
    %48 = vector.shape_cast %47 : vector<8x32xf32> to vector<1x8x32xf32>
    %49 = vector.broadcast %48 : vector<1x8x32xf32> to vector<2x8x32xf32>
    %50 = arith.mulf %45, %49 : vector<2x8x32xf32>
    %51 = arith.mulf %40, %42 : vector<16x4xf32>
    %cst_23 = arith.constant dense<0.000000e+00> : vector<16x32xf32>
    %52 = tpu.matmul %51, %21, %cst_23 {dimension_numbers = #tpu.dot_dimension_numbers<[1], [0], [0], [1], [0, 0, 1, 1], [], []>} : vector<16x4xf32>, vector<4x32xf32>, vector<16x32xf32> -> vector<16x32xf32>
    %53 = vector.shape_cast %52 : vector<16x32xf32> to vector<2x8x32xf32>
    %54 = vector.extract_strided_slice %19 {offsets = [1, 0, 0], sizes = [1, 8, 32], strides = [1, 1, 1]} : vector<2x8x32xf32> to vector<1x8x32xf32>
    %55 = vector.shape_cast %54 : vector<1x8x32xf32> to vector<8x32xf32>
    %56 = vector.shape_cast %55 : vector<8x32xf32> to vector<1x8x32xf32>
    %57 = vector.broadcast %56 : vector<1x8x32xf32> to vector<2x8x32xf32>
    %58 = arith.mulf %53, %57 : vector<2x8x32xf32>
    %59 = arith.addf %50, %58 : vector<2x8x32xf32>
    %60 = vector.shape_cast %59 : vector<2x8x32xf32> to vector<16x32xf32>
    %c0_24 = arith.constant 0 : index
    %c0_25 = arith.constant 0 : index
    %61 = vector.load %arg11[%c0_24, %c0_25] : memref<32x16xf32, #tpu.memory_space<vmem>>, vector<32x16xf32>
    %cst_26 = arith.constant dense<0.000000e+00> : vector<16x16xf32>
    %62 = tpu.matmul %60, %61, %cst_26 {dimension_numbers = #tpu.dot_dimension_numbers<[1], [0], [0], [1], [0, 0, 1, 1], [], []>} : vector<16x32xf32>, vector<32x16xf32>, vector<16x16xf32> -> vector<16x16xf32>
    %c0_27 = arith.constant 0 : index
    %c0_28 = arith.constant 0 : index
    %63 = vector.load %arg12[%c0_27, %c0_28] : memref<1x16xf32, #tpu.memory_space<vmem>>, vector<1x16xf32>
    %64 = vector.broadcast %63 : vector<1x16xf32> to vector<16x16xf32>
    %65 = arith.addf %62, %64 : vector<16x16xf32>
    %66 = math.tanh %65 : vector<16x16xf32>
    %67 = vector.shape_cast %66 : vector<16x16xf32> to vector<2x8x16xf32>
    %c0_29 = arith.constant 0 : index
    %c0_30 = arith.constant 0 : index
    %68 = vector.load %arg13[%c0_29, %c0_30] : memref<1x16xf32, #tpu.memory_space<vmem>>, vector<1x16xf32>
    %69 = vector.shape_cast %68 : vector<1x16xf32> to vector<1x1x16xf32>
    %70 = vector.broadcast %69 : vector<1x1x16xf32> to vector<2x8x16xf32>
    %71 = arith.mulf %67, %70 : vector<2x8x16xf32>
    %cst_31 = arith.constant dense<0.000000e+00> : vector<2x8xf32>
    %72 = vector.multi_reduction <add>, %71, %cst_31 [2] : vector<2x8x16xf32> to vector<2x8xf32>
    %cst_32 = arith.constant dense<0xFF800000> : vector<2xf32>
    %73 = vector.multi_reduction <maximumf>, %72, %cst_32 [1] : vector<2x8xf32> to vector<2xf32>
    %74 = vector.shape_cast %73 : vector<2xf32> to vector<2x1xf32>
    %75 = vector.broadcast %74 : vector<2x1xf32> to vector<2x8xf32>
    %76 = arith.subf %72, %75 : vector<2x8xf32>
    %77 = math.exp %76 : vector<2x8xf32>
    %cst_33 = arith.constant dense<0.000000e+00> : vector<2xf32>
    %78 = vector.multi_reduction <add>, %77, %cst_33 [1] : vector<2x8xf32> to vector<2xf32>
    %79 = vector.shape_cast %78 : vector<2xf32> to vector<2x1xf32>
    %80 = vector.broadcast %79 : vector<2x1xf32> to vector<2x8xf32>
    %81 = arith.divf %77, %80 : vector<2x8xf32>
    %82 = vector.shape_cast %81 : vector<2x8xf32> to vector<2x8x1xf32>
    %83 = vector.broadcast %82 : vector<2x8x1xf32> to vector<2x8x32xf32>
    %84 = arith.mulf %83, %59 : vector<2x8x32xf32>
    %cst_34 = arith.constant dense<0.000000e+00> : vector<2x32xf32>
    %85 = vector.multi_reduction <add>, %84, %cst_34 [1] : vector<2x8x32xf32> to vector<2x32xf32>
    %c0_35 = arith.constant 0 : index
    %c0_36 = arith.constant 0 : index
    %86 = vector.load %arg9[%c0_35, %c0_36] : memref<32x32xf32, #tpu.memory_space<vmem>>, vector<32x32xf32>
    %cst_37 = arith.constant dense<0.000000e+00> : vector<2x32xf32>
    %87 = tpu.matmul %85, %86, %cst_37 {dimension_numbers = #tpu.dot_dimension_numbers<[1], [0], [0], [1], [0, 0, 1, 1], [], []>} : vector<2x32xf32>, vector<32x32xf32>, vector<2x32xf32> -> vector<2x32xf32>
    %c0_38 = arith.constant 0 : index
    %c0_39 = arith.constant 0 : index
    %88 = vector.load %arg10[%c0_38, %c0_39] : memref<1x32xf32, #tpu.memory_space<vmem>>, vector<1x32xf32>
    %89 = vector.broadcast %88 : vector<1x32xf32> to vector<2x32xf32>
    %90 = arith.addf %87, %89 : vector<2x32xf32>
    %c0_40 = arith.constant 0 : index
    %c4 = arith.constant 4 : index
    %c0_41 = arith.constant 0 : index
    %91 = vector.load %arg0[%c0_40, %c4, %c0_41] : memref<2x8x32xf32, #tpu.memory_space<vmem>>, vector<2x4x32xf32>
    %92 = vector.shape_cast %91 : vector<2x4x32xf32> to vector<8x32xf32>
    %c0_42 = arith.constant 0 : index
    %c0_43 = arith.constant 0 : index
    %93 = vector.load %arg14[%c0_42, %c0_43] : memref<32x32xf32, #tpu.memory_space<vmem>>, vector<32x32xf32>
    %cst_44 = arith.constant dense<0.000000e+00> : vector<8x32xf32>
    %94 = tpu.matmul %92, %93, %cst_44 {dimension_numbers = #tpu.dot_dimension_numbers<[1], [0], [0], [1], [0, 0, 1, 1], [], []>} : vector<8x32xf32>, vector<32x32xf32>, vector<8x32xf32> -> vector<8x32xf32>
    %95 = vector.shape_cast %94 : vector<8x32xf32> to vector<2x4x32xf32>
    %c0_45 = arith.constant 0 : index
    %c0_46 = arith.constant 0 : index
    %96 = vector.load %arg15[%c0_45, %c0_46] : memref<32x32xf32, #tpu.memory_space<vmem>>, vector<32x32xf32>
    %cst_47 = arith.constant dense<0.000000e+00> : vector<8x32xf32>
    %97 = tpu.matmul %92, %96, %cst_47 {dimension_numbers = #tpu.dot_dimension_numbers<[1], [0], [0], [1], [0, 0, 1, 1], [], []>} : vector<8x32xf32>, vector<32x32xf32>, vector<8x32xf32> -> vector<8x32xf32>
    %98 = vector.shape_cast %97 : vector<8x32xf32> to vector<2x4x32xf32>
    %c0_48 = arith.constant 0 : index
    %c0_49 = arith.constant 0 : index
    %99 = vector.load %arg16[%c0_48, %c0_49] : memref<32x32xf32, #tpu.memory_space<vmem>>, vector<32x32xf32>
    %cst_50 = arith.constant dense<0.000000e+00> : vector<8x32xf32>
    %100 = tpu.matmul %92, %99, %cst_50 {dimension_numbers = #tpu.dot_dimension_numbers<[1], [0], [0], [1], [0, 0, 1, 1], [], []>} : vector<8x32xf32>, vector<32x32xf32>, vector<8x32xf32> -> vector<8x32xf32>
    %c0_51 = arith.constant 0 : index
    %c0_52 = arith.constant 0 : index
    %101 = vector.load %arg22[%c0_51, %c0_52] : memref<1x32xf32, #tpu.memory_space<vmem>>, vector<1x32xf32>
    %102 = vector.broadcast %101 : vector<1x32xf32> to vector<8x32xf32>
    %103 = arith.addf %100, %102 : vector<8x32xf32>
    %104 = vector.shape_cast %103 : vector<8x32xf32> to vector<2x4x32xf32>
    %105 = vector.extract_strided_slice %95 {offsets = [0, 0, 0], sizes = [2, 1, 32], strides = [1, 1, 1]} : vector<2x4x32xf32> to vector<2x1x32xf32>
    %106 = vector.shape_cast %105 : vector<2x1x32xf32> to vector<2x32xf32>
    %c0_53 = arith.constant 0 : index
    %c0_54 = arith.constant 0 : index
    %107 = vector.load %arg20[%c0_53, %c0_54] : memref<1x32xf32, #tpu.memory_space<vmem>>, vector<1x32xf32>
    %108 = vector.broadcast %107 : vector<1x32xf32> to vector<2x32xf32>
    %109 = arith.addf %106, %108 : vector<2x32xf32>
    %110 = arith.negf %109 : vector<2x32xf32>
    %111 = math.exp %110 : vector<2x32xf32>
    %cst_55 = arith.constant 1.000000e+00 : f32
    %112 = vector.broadcast %cst_55 : f32 to vector<2x32xf32>
    %113 = arith.addf %112, %111 : vector<2x32xf32>
    %114 = arith.divf %112, %113 : vector<2x32xf32>
    %115 = vector.extract_strided_slice %98 {offsets = [0, 0, 0], sizes = [2, 1, 32], strides = [1, 1, 1]} : vector<2x4x32xf32> to vector<2x1x32xf32>
    %116 = vector.shape_cast %115 : vector<2x1x32xf32> to vector<2x32xf32>
    %c0_56 = arith.constant 0 : index
    %c0_57 = arith.constant 0 : index
    %117 = vector.load %arg21[%c0_56, %c0_57] : memref<1x32xf32, #tpu.memory_space<vmem>>, vector<1x32xf32>
    %118 = vector.broadcast %117 : vector<1x32xf32> to vector<2x32xf32>
    %119 = arith.addf %116, %118 : vector<2x32xf32>
    %120 = arith.negf %119 : vector<2x32xf32>
    %121 = math.exp %120 : vector<2x32xf32>
    %cst_58 = arith.constant 1.000000e+00 : f32
    %122 = vector.broadcast %cst_58 : f32 to vector<2x32xf32>
    %123 = arith.addf %122, %121 : vector<2x32xf32>
    %124 = arith.divf %122, %123 : vector<2x32xf32>
    %125 = vector.extract_strided_slice %104 {offsets = [0, 0, 0], sizes = [2, 1, 32], strides = [1, 1, 1]} : vector<2x4x32xf32> to vector<2x1x32xf32>
    %126 = vector.shape_cast %125 : vector<2x1x32xf32> to vector<2x32xf32>
    %c0_59 = arith.constant 0 : index
    %c0_60 = arith.constant 0 : index
    %127 = vector.load %arg23[%c0_59, %c0_60] : memref<1x32xf32, #tpu.memory_space<vmem>>, vector<1x32xf32>
    %128 = vector.broadcast %127 : vector<1x32xf32> to vector<2x32xf32>
    %129 = arith.mulf %114, %128 : vector<2x32xf32>
    %130 = arith.addf %126, %129 : vector<2x32xf32>
    %131 = math.tanh %130 : vector<2x32xf32>
    %cst_61 = arith.constant 1.000000e+00 : f32
    %132 = vector.broadcast %cst_61 : f32 to vector<2x32xf32>
    %133 = arith.subf %132, %124 : vector<2x32xf32>
    %134 = arith.mulf %133, %131 : vector<2x32xf32>
    %c0_62 = arith.constant 0 : index
    %c0_63 = arith.constant 0 : index
    %135 = vector.load %arg17[%c0_62, %c0_63] : memref<32x32xf32, #tpu.memory_space<vmem>>, vector<32x32xf32>
    %cst_64 = arith.constant dense<0.000000e+00> : vector<2x32xf32>
    %136 = tpu.matmul %134, %135, %cst_64 {dimension_numbers = #tpu.dot_dimension_numbers<[1], [0], [0], [1], [0, 0, 1, 1], [], []>} : vector<2x32xf32>, vector<32x32xf32>, vector<2x32xf32> -> vector<2x32xf32>
    %c0_65 = arith.constant 0 : index
    %c0_66 = arith.constant 0 : index
    %137 = vector.load %arg18[%c0_65, %c0_66] : memref<32x32xf32, #tpu.memory_space<vmem>>, vector<32x32xf32>
    %cst_67 = arith.constant dense<0.000000e+00> : vector<2x32xf32>
    %138 = tpu.matmul %134, %137, %cst_67 {dimension_numbers = #tpu.dot_dimension_numbers<[1], [0], [0], [1], [0, 0, 1, 1], [], []>} : vector<2x32xf32>, vector<32x32xf32>, vector<2x32xf32> -> vector<2x32xf32>
    %c0_68 = arith.constant 0 : index
    %c0_69 = arith.constant 0 : index
    %139 = vector.load %arg19[%c0_68, %c0_69] : memref<32x32xf32, #tpu.memory_space<vmem>>, vector<32x32xf32>
    %cst_70 = arith.constant dense<0.000000e+00> : vector<2x32xf32>
    %140 = tpu.matmul %134, %139, %cst_70 {dimension_numbers = #tpu.dot_dimension_numbers<[1], [0], [0], [1], [0, 0, 1, 1], [], []>} : vector<2x32xf32>, vector<32x32xf32>, vector<2x32xf32> -> vector<2x32xf32>
    %c0_71 = arith.constant 0 : index
    %c0_72 = arith.constant 0 : index
    %141 = vector.load %arg23[%c0_71, %c0_72] : memref<1x32xf32, #tpu.memory_space<vmem>>, vector<1x32xf32>
    %142 = vector.broadcast %141 : vector<1x32xf32> to vector<2x32xf32>
    %143 = arith.addf %140, %142 : vector<2x32xf32>
    %144 = vector.extract_strided_slice %95 {offsets = [0, 1, 0], sizes = [2, 1, 32], strides = [1, 1, 1]} : vector<2x4x32xf32> to vector<2x1x32xf32>
    %145 = vector.shape_cast %144 : vector<2x1x32xf32> to vector<2x32xf32>
    %146 = arith.addf %145, %136 : vector<2x32xf32>
    %c0_73 = arith.constant 0 : index
    %c0_74 = arith.constant 0 : index
    %147 = vector.load %arg20[%c0_73, %c0_74] : memref<1x32xf32, #tpu.memory_space<vmem>>, vector<1x32xf32>
    %148 = vector.broadcast %147 : vector<1x32xf32> to vector<2x32xf32>
    %149 = arith.addf %146, %148 : vector<2x32xf32>
    %150 = arith.negf %149 : vector<2x32xf32>
    %151 = math.exp %150 : vector<2x32xf32>
    %cst_75 = arith.constant 1.000000e+00 : f32
    %152 = vector.broadcast %cst_75 : f32 to vector<2x32xf32>
    %153 = arith.addf %152, %151 : vector<2x32xf32>
    %154 = arith.divf %152, %153 : vector<2x32xf32>
    %155 = vector.extract_strided_slice %98 {offsets = [0, 1, 0], sizes = [2, 1, 32], strides = [1, 1, 1]} : vector<2x4x32xf32> to vector<2x1x32xf32>
    %156 = vector.shape_cast %155 : vector<2x1x32xf32> to vector<2x32xf32>
    %157 = arith.addf %156, %138 : vector<2x32xf32>
    %c0_76 = arith.constant 0 : index
    %c0_77 = arith.constant 0 : index
    %158 = vector.load %arg21[%c0_76, %c0_77] : memref<1x32xf32, #tpu.memory_space<vmem>>, vector<1x32xf32>
    %159 = vector.broadcast %158 : vector<1x32xf32> to vector<2x32xf32>
    %160 = arith.addf %157, %159 : vector<2x32xf32>
    %161 = arith.negf %160 : vector<2x32xf32>
    %162 = math.exp %161 : vector<2x32xf32>
    %cst_78 = arith.constant 1.000000e+00 : f32
    %163 = vector.broadcast %cst_78 : f32 to vector<2x32xf32>
    %164 = arith.addf %163, %162 : vector<2x32xf32>
    %165 = arith.divf %163, %164 : vector<2x32xf32>
    %166 = vector.extract_strided_slice %104 {offsets = [0, 1, 0], sizes = [2, 1, 32], strides = [1, 1, 1]} : vector<2x4x32xf32> to vector<2x1x32xf32>
    %167 = vector.shape_cast %166 : vector<2x1x32xf32> to vector<2x32xf32>
    %168 = arith.mulf %154, %143 : vector<2x32xf32>
    %169 = arith.addf %167, %168 : vector<2x32xf32>
    %170 = math.tanh %169 : vector<2x32xf32>
    %cst_79 = arith.constant 1.000000e+00 : f32
    %171 = vector.broadcast %cst_79 : f32 to vector<2x32xf32>
    %172 = arith.subf %171, %165 : vector<2x32xf32>
    %173 = arith.mulf %172, %170 : vector<2x32xf32>
    %174 = arith.mulf %165, %134 : vector<2x32xf32>
    %175 = arith.addf %173, %174 : vector<2x32xf32>
    %c0_80 = arith.constant 0 : index
    %c0_81 = arith.constant 0 : index
    %176 = vector.load %arg17[%c0_80, %c0_81] : memref<32x32xf32, #tpu.memory_space<vmem>>, vector<32x32xf32>
    %cst_82 = arith.constant dense<0.000000e+00> : vector<2x32xf32>
    %177 = tpu.matmul %175, %176, %cst_82 {dimension_numbers = #tpu.dot_dimension_numbers<[1], [0], [0], [1], [0, 0, 1, 1], [], []>} : vector<2x32xf32>, vector<32x32xf32>, vector<2x32xf32> -> vector<2x32xf32>
    %c0_83 = arith.constant 0 : index
    %c0_84 = arith.constant 0 : index
    %178 = vector.load %arg18[%c0_83, %c0_84] : memref<32x32xf32, #tpu.memory_space<vmem>>, vector<32x32xf32>
    %cst_85 = arith.constant dense<0.000000e+00> : vector<2x32xf32>
    %179 = tpu.matmul %175, %178, %cst_85 {dimension_numbers = #tpu.dot_dimension_numbers<[1], [0], [0], [1], [0, 0, 1, 1], [], []>} : vector<2x32xf32>, vector<32x32xf32>, vector<2x32xf32> -> vector<2x32xf32>
    %c0_86 = arith.constant 0 : index
    %c0_87 = arith.constant 0 : index
    %180 = vector.load %arg19[%c0_86, %c0_87] : memref<32x32xf32, #tpu.memory_space<vmem>>, vector<32x32xf32>
    %cst_88 = arith.constant dense<0.000000e+00> : vector<2x32xf32>
    %181 = tpu.matmul %175, %180, %cst_88 {dimension_numbers = #tpu.dot_dimension_numbers<[1], [0], [0], [1], [0, 0, 1, 1], [], []>} : vector<2x32xf32>, vector<32x32xf32>, vector<2x32xf32> -> vector<2x32xf32>
    %c0_89 = arith.constant 0 : index
    %c0_90 = arith.constant 0 : index
    %182 = vector.load %arg23[%c0_89, %c0_90] : memref<1x32xf32, #tpu.memory_space<vmem>>, vector<1x32xf32>
    %183 = vector.broadcast %182 : vector<1x32xf32> to vector<2x32xf32>
    %184 = arith.addf %181, %183 : vector<2x32xf32>
    %185 = vector.extract_strided_slice %95 {offsets = [0, 2, 0], sizes = [2, 1, 32], strides = [1, 1, 1]} : vector<2x4x32xf32> to vector<2x1x32xf32>
    %186 = vector.shape_cast %185 : vector<2x1x32xf32> to vector<2x32xf32>
    %187 = arith.addf %186, %177 : vector<2x32xf32>
    %c0_91 = arith.constant 0 : index
    %c0_92 = arith.constant 0 : index
    %188 = vector.load %arg20[%c0_91, %c0_92] : memref<1x32xf32, #tpu.memory_space<vmem>>, vector<1x32xf32>
    %189 = vector.broadcast %188 : vector<1x32xf32> to vector<2x32xf32>
    %190 = arith.addf %187, %189 : vector<2x32xf32>
    %191 = arith.negf %190 : vector<2x32xf32>
    %192 = math.exp %191 : vector<2x32xf32>
    %cst_93 = arith.constant 1.000000e+00 : f32
    %193 = vector.broadcast %cst_93 : f32 to vector<2x32xf32>
    %194 = arith.addf %193, %192 : vector<2x32xf32>
    %195 = arith.divf %193, %194 : vector<2x32xf32>
    %196 = vector.extract_strided_slice %98 {offsets = [0, 2, 0], sizes = [2, 1, 32], strides = [1, 1, 1]} : vector<2x4x32xf32> to vector<2x1x32xf32>
    %197 = vector.shape_cast %196 : vector<2x1x32xf32> to vector<2x32xf32>
    %198 = arith.addf %197, %179 : vector<2x32xf32>
    %c0_94 = arith.constant 0 : index
    %c0_95 = arith.constant 0 : index
    %199 = vector.load %arg21[%c0_94, %c0_95] : memref<1x32xf32, #tpu.memory_space<vmem>>, vector<1x32xf32>
    %200 = vector.broadcast %199 : vector<1x32xf32> to vector<2x32xf32>
    %201 = arith.addf %198, %200 : vector<2x32xf32>
    %202 = arith.negf %201 : vector<2x32xf32>
    %203 = math.exp %202 : vector<2x32xf32>
    %cst_96 = arith.constant 1.000000e+00 : f32
    %204 = vector.broadcast %cst_96 : f32 to vector<2x32xf32>
    %205 = arith.addf %204, %203 : vector<2x32xf32>
    %206 = arith.divf %204, %205 : vector<2x32xf32>
    %207 = vector.extract_strided_slice %104 {offsets = [0, 2, 0], sizes = [2, 1, 32], strides = [1, 1, 1]} : vector<2x4x32xf32> to vector<2x1x32xf32>
    %208 = vector.shape_cast %207 : vector<2x1x32xf32> to vector<2x32xf32>
    %209 = arith.mulf %195, %184 : vector<2x32xf32>
    %210 = arith.addf %208, %209 : vector<2x32xf32>
    %211 = math.tanh %210 : vector<2x32xf32>
    %cst_97 = arith.constant 1.000000e+00 : f32
    %212 = vector.broadcast %cst_97 : f32 to vector<2x32xf32>
    %213 = arith.subf %212, %206 : vector<2x32xf32>
    %214 = arith.mulf %213, %211 : vector<2x32xf32>
    %215 = arith.mulf %206, %175 : vector<2x32xf32>
    %216 = arith.addf %214, %215 : vector<2x32xf32>
    %c0_98 = arith.constant 0 : index
    %c0_99 = arith.constant 0 : index
    %217 = vector.load %arg17[%c0_98, %c0_99] : memref<32x32xf32, #tpu.memory_space<vmem>>, vector<32x32xf32>
    %cst_100 = arith.constant dense<0.000000e+00> : vector<2x32xf32>
    %218 = tpu.matmul %216, %217, %cst_100 {dimension_numbers = #tpu.dot_dimension_numbers<[1], [0], [0], [1], [0, 0, 1, 1], [], []>} : vector<2x32xf32>, vector<32x32xf32>, vector<2x32xf32> -> vector<2x32xf32>
    %c0_101 = arith.constant 0 : index
    %c0_102 = arith.constant 0 : index
    %219 = vector.load %arg18[%c0_101, %c0_102] : memref<32x32xf32, #tpu.memory_space<vmem>>, vector<32x32xf32>
    %cst_103 = arith.constant dense<0.000000e+00> : vector<2x32xf32>
    %220 = tpu.matmul %216, %219, %cst_103 {dimension_numbers = #tpu.dot_dimension_numbers<[1], [0], [0], [1], [0, 0, 1, 1], [], []>} : vector<2x32xf32>, vector<32x32xf32>, vector<2x32xf32> -> vector<2x32xf32>
    %c0_104 = arith.constant 0 : index
    %c0_105 = arith.constant 0 : index
    %221 = vector.load %arg19[%c0_104, %c0_105] : memref<32x32xf32, #tpu.memory_space<vmem>>, vector<32x32xf32>
    %cst_106 = arith.constant dense<0.000000e+00> : vector<2x32xf32>
    %222 = tpu.matmul %216, %221, %cst_106 {dimension_numbers = #tpu.dot_dimension_numbers<[1], [0], [0], [1], [0, 0, 1, 1], [], []>} : vector<2x32xf32>, vector<32x32xf32>, vector<2x32xf32> -> vector<2x32xf32>
    %c0_107 = arith.constant 0 : index
    %c0_108 = arith.constant 0 : index
    %223 = vector.load %arg23[%c0_107, %c0_108] : memref<1x32xf32, #tpu.memory_space<vmem>>, vector<1x32xf32>
    %224 = vector.broadcast %223 : vector<1x32xf32> to vector<2x32xf32>
    %225 = arith.addf %222, %224 : vector<2x32xf32>
    %226 = vector.extract_strided_slice %95 {offsets = [0, 3, 0], sizes = [2, 1, 32], strides = [1, 1, 1]} : vector<2x4x32xf32> to vector<2x1x32xf32>
    %227 = vector.shape_cast %226 : vector<2x1x32xf32> to vector<2x32xf32>
    %228 = arith.addf %227, %218 : vector<2x32xf32>
    %c0_109 = arith.constant 0 : index
    %c0_110 = arith.constant 0 : index
    %229 = vector.load %arg20[%c0_109, %c0_110] : memref<1x32xf32, #tpu.memory_space<vmem>>, vector<1x32xf32>
    %230 = vector.broadcast %229 : vector<1x32xf32> to vector<2x32xf32>
    %231 = arith.addf %228, %230 : vector<2x32xf32>
    %232 = arith.negf %231 : vector<2x32xf32>
    %233 = math.exp %232 : vector<2x32xf32>
    %cst_111 = arith.constant 1.000000e+00 : f32
    %234 = vector.broadcast %cst_111 : f32 to vector<2x32xf32>
    %235 = arith.addf %234, %233 : vector<2x32xf32>
    %236 = arith.divf %234, %235 : vector<2x32xf32>
    %237 = vector.extract_strided_slice %98 {offsets = [0, 3, 0], sizes = [2, 1, 32], strides = [1, 1, 1]} : vector<2x4x32xf32> to vector<2x1x32xf32>
    %238 = vector.shape_cast %237 : vector<2x1x32xf32> to vector<2x32xf32>
    %239 = arith.addf %238, %220 : vector<2x32xf32>
    %c0_112 = arith.constant 0 : index
    %c0_113 = arith.constant 0 : index
    %240 = vector.load %arg21[%c0_112, %c0_113] : memref<1x32xf32, #tpu.memory_space<vmem>>, vector<1x32xf32>
    %241 = vector.broadcast %240 : vector<1x32xf32> to vector<2x32xf32>
    %242 = arith.addf %239, %241 : vector<2x32xf32>
    %243 = arith.negf %242 : vector<2x32xf32>
    %244 = math.exp %243 : vector<2x32xf32>
    %cst_114 = arith.constant 1.000000e+00 : f32
    %245 = vector.broadcast %cst_114 : f32 to vector<2x32xf32>
    %246 = arith.addf %245, %244 : vector<2x32xf32>
    %247 = arith.divf %245, %246 : vector<2x32xf32>
    %248 = vector.extract_strided_slice %104 {offsets = [0, 3, 0], sizes = [2, 1, 32], strides = [1, 1, 1]} : vector<2x4x32xf32> to vector<2x1x32xf32>
    %249 = vector.shape_cast %248 : vector<2x1x32xf32> to vector<2x32xf32>
    %250 = arith.mulf %236, %225 : vector<2x32xf32>
    %251 = arith.addf %249, %250 : vector<2x32xf32>
    %252 = math.tanh %251 : vector<2x32xf32>
    %cst_115 = arith.constant 1.000000e+00 : f32
    %253 = vector.broadcast %cst_115 : f32 to vector<2x32xf32>
    %254 = arith.subf %253, %247 : vector<2x32xf32>
    %255 = arith.mulf %254, %252 : vector<2x32xf32>
    %256 = arith.mulf %247, %216 : vector<2x32xf32>
    %257 = arith.addf %255, %256 : vector<2x32xf32>
    %c0_116 = arith.constant 0 : index
    %c0_117 = arith.constant 0 : index
    %258 = vector.load %arg24[%c0_116, %c0_117] : memref<32x16xf32, #tpu.memory_space<vmem>>, vector<32x16xf32>
    %cst_118 = arith.constant dense<0.000000e+00> : vector<2x16xf32>
    %259 = tpu.matmul %257, %258, %cst_118 {dimension_numbers = #tpu.dot_dimension_numbers<[1], [0], [0], [1], [0, 0, 1, 1], [], []>} : vector<2x32xf32>, vector<32x16xf32>, vector<2x16xf32> -> vector<2x16xf32>
    %c0_119 = arith.constant 0 : index
    %c0_120 = arith.constant 0 : index
    %260 = vector.load %arg25[%c0_119, %c0_120] : memref<1x16xf32, #tpu.memory_space<vmem>>, vector<1x16xf32>
    %261 = vector.broadcast %260 : vector<1x16xf32> to vector<2x16xf32>
    %262 = arith.addf %259, %261 : vector<2x16xf32>
    %263 = math.tanh %262 : vector<2x16xf32>
    %c0_121 = arith.constant 0 : index
    %c0_122 = arith.constant 0 : index
    %264 = vector.load %arg24[%c0_121, %c0_122] : memref<32x16xf32, #tpu.memory_space<vmem>>, vector<32x16xf32>
    %cst_123 = arith.constant dense<0.000000e+00> : vector<2x16xf32>
    %265 = tpu.matmul %90, %264, %cst_123 {dimension_numbers = #tpu.dot_dimension_numbers<[1], [0], [0], [1], [0, 0, 1, 1], [], []>} : vector<2x32xf32>, vector<32x16xf32>, vector<2x16xf32> -> vector<2x16xf32>
    %c0_124 = arith.constant 0 : index
    %c0_125 = arith.constant 0 : index
    %266 = vector.load %arg25[%c0_124, %c0_125] : memref<1x16xf32, #tpu.memory_space<vmem>>, vector<1x16xf32>
    %267 = vector.broadcast %266 : vector<1x16xf32> to vector<2x16xf32>
    %268 = arith.addf %265, %267 : vector<2x16xf32>
    %269 = math.tanh %268 : vector<2x16xf32>
    %c0_126 = arith.constant 0 : index
    %c0_127 = arith.constant 0 : index
    %270 = vector.load %arg26[%c0_126, %c0_127] : memref<1x16xf32, #tpu.memory_space<vmem>>, vector<1x16xf32>
    %271 = vector.broadcast %270 : vector<1x16xf32> to vector<2x16xf32>
    %272 = arith.mulf %263, %271 : vector<2x16xf32>
    %cst_128 = arith.constant dense<0.000000e+00> : vector<2xf32>
    %273 = vector.multi_reduction <add>, %272, %cst_128 [1] : vector<2x16xf32> to vector<2xf32>
    %274 = vector.shape_cast %273 : vector<2xf32> to vector<2x1xf32>
    %c0_129 = arith.constant 0 : index
    %c0_130 = arith.constant 0 : index
    %275 = vector.load %arg26[%c0_129, %c0_130] : memref<1x16xf32, #tpu.memory_space<vmem>>, vector<1x16xf32>
    %276 = vector.broadcast %275 : vector<1x16xf32> to vector<2x16xf32>
    %277 = arith.mulf %269, %276 : vector<2x16xf32>
    %cst_131 = arith.constant dense<0.000000e+00> : vector<2xf32>
    %278 = vector.multi_reduction <add>, %277, %cst_131 [1] : vector<2x16xf32> to vector<2xf32>
    %279 = vector.shape_cast %278 : vector<2xf32> to vector<2x1xf32>
    %280 = arith.maximumf %274, %279 : vector<2x1xf32>
    %281 = arith.subf %274, %280 : vector<2x1xf32>
    %282 = math.exp %281 : vector<2x1xf32>
    %283 = arith.subf %279, %280 : vector<2x1xf32>
    %284 = math.exp %283 : vector<2x1xf32>
    %285 = vector.broadcast %282 : vector<2x1xf32> to vector<2x32xf32>
    %286 = arith.mulf %285, %257 : vector<2x32xf32>
    %287 = vector.broadcast %284 : vector<2x1xf32> to vector<2x32xf32>
    %288 = arith.mulf %287, %90 : vector<2x32xf32>
    %289 = arith.addf %286, %288 : vector<2x32xf32>
    %290 = arith.addf %282, %284 : vector<2x1xf32>
    %291 = vector.broadcast %290 : vector<2x1xf32> to vector<2x32xf32>
    %292 = arith.divf %289, %291 : vector<2x32xf32>
    %c0_132 = arith.constant 0 : index
    %c0_133 = arith.constant 0 : index
    %293 = vector.load %arg27[%c0_132, %c0_133] : memref<2x32xf32, #tpu.memory_space<vmem>>, vector<2x32xf32>
    tpu.vector_store %arg27[%c0_132, %c0_133], %292 {strides = array<i32>} : memref<2x32xf32, #tpu.memory_space<vmem>>, vector<2x32xf32>,
    return
  }
}

</mosaic_0001>

<llo_original>
// kernel: user_encoder_forward.1
$region0: #{user_encoder_forward.1}
  #allocation0 [shape = 'u32[]', space=smem, size = 0x4, offset = 0x4, fixed_abs, tag = 'smem constant byte address 0x4 - core index']
  #allocation1 [shape = 'u32[72,128]{1,0:T(1,128)}', space=vmem, size = 0x9000, scoped, tag = 'internal scratch']
  %s0 = inlined_call_operand.hbm [shape: f32[2,8,32], index: 0, kind: input, shape index: {}]
  %s1 = inlined_call_operand.vmem [shape: f32[32,32], index: 1, kind: input, shape index: {}]
  %s2 = inlined_call_operand.vmem [shape: f32[1,32], index: 2, kind: input, shape index: {}]
  %s3 = inlined_call_operand.vmem [shape: f32[32,32], index: 3, kind: input, shape index: {}]
  %s4 = inlined_call_operand.hbm [shape: f32[1,32], index: 4, kind: input, shape index: {}]
  %s5 = inlined_call_operand.vmem [shape: f32[32,32], index: 5, kind: input, shape index: {}]
  %s6 = inlined_call_operand.hbm [shape: f32[1,32], index: 6, kind: input, shape index: {}]
  %s7 = inlined_call_operand.vmem [shape: f32[32,4], index: 7, kind: input, shape index: {}]
  %s8 = inlined_call_operand.hbm [shape: f32[4,32], index: 8, kind: input, shape index: {}]
  %s9 = inlined_call_operand.hbm [shape: f32[32,32], index: 9, kind: input, shape index: {}]
  %s10 = inlined_call_operand.hbm [shape: f32[1,32], index: 10, kind: input, shape index: {}]
  %s11 = inlined_call_operand.vmem [shape: f32[32,16], index: 11, kind: input, shape index: {}]
  %s12 = inlined_call_operand.hbm [shape: f32[1,16], index: 12, kind: input, shape index: {}]
  %s13 = inlined_call_operand.hbm [shape: f32[1,16], index: 13, kind: input, shape index: {}]
  %s14 = inlined_call_operand.vmem [shape: f32[32,32], index: 14, kind: input, shape index: {}]
  %s15 = inlined_call_operand.hbm [shape: f32[32,32], index: 15, kind: input, shape index: {}]
  %s16 = inlined_call_operand.hbm [shape: f32[32,32], index: 16, kind: input, shape index: {}]
  %s17 = inlined_call_operand.hbm [shape: f32[32,32], index: 17, kind: input, shape index: {}]
  %s18 = inlined_call_operand.hbm [shape: f32[32,32], index: 18, kind: input, shape index: {}]
  %s19 = inlined_call_operand.hbm [shape: f32[32,32], index: 19, kind: input, shape index: {}]
  %s20 = inlined_call_operand.hbm [shape: f32[1,32], index: 20, kind: input, shape index: {}]
  %s21 = inlined_call_operand.hbm [shape: f32[1,32], index: 21, kind: input, shape index: {}]
  %s22 = inlined_call_operand.hbm [shape: f32[1,32], index: 22, kind: input, shape index: {}]
  %s23 = inlined_call_operand.hbm [shape: f32[1,32], index: 23, kind: input, shape index: {}]
  %s24 = inlined_call_operand.vmem [shape: f32[32,16], index: 24, kind: input, shape index: {}]
  %s25 = inlined_call_operand.hbm [shape: f32[1,16], index: 25, kind: input, shape index: {}]
  %s26 = inlined_call_operand.hbm [shape: f32[1,16], index: 26, kind: input, shape index: {}]
  %s27 = inlined_call_operand.hbm [shape: f32[2,32], index: 27, kind: output, shape index: {}]
  %s28 = sld [smem:[#allocation0]]
  $region194: #{user_encoder_forward.1} parent=0
    _
  %s30 = ssub.s32 1, %s28
  %s31 = scalar_select 0, %s30, %s28
  $region1: #{user_encoder_forward.1} parent=0
    #allocation2 [shape = 'u8[8192]{0}', space=vmem, size = 0x2000, scoped, tag = 'input window, operand 0, single buffered']
    #allocation3 [shape = 's32[1]{0}', space=sflag, size = 0x4, scoped, tag = 'scoped memory for user_encoder_forward.1']
    #allocation4 [shape = 's32[1]{0}', space=sflag, size = 0x4, scoped, tag = 'scoped memory for user_encoder_forward.1']
    #allocation5 [shape = 'u8[512]{0}', space=vmem, size = 0x400, scoped, tag = 'input window, operand 4, single buffered']
    #allocation6 [shape = 's32[1]{0}', space=sflag, size = 0x4, scoped, tag = 'scoped memory for user_encoder_forward.1']
    #allocation7 [shape = 'u8[512]{0}', space=vmem, size = 0x400, scoped, tag = 'input window, operand 6, single buffered']
    #allocation8 [shape = 'u8[2048]{0}', space=vmem, size = 0x800, scoped, tag = 'input window, operand 8, single buffered']
    #allocation9 [shape = 's32[1]{0}', space=sflag, size = 0x4, scoped, tag = 'scoped memory for user_encoder_forward.1']
    #allocation10 [shape = 'u8[16384]{0}', space=vmem, size = 0x4000, scoped, tag = 'input window, operand 9, single buffered']
    #allocation11 [shape = 'u8[512]{0}', space=vmem, size = 0x400, scoped, tag = 'input window, operand 10, single buffered']
    #allocation12 [shape = 's32[1]{0}', space=sflag, size = 0x4, scoped, tag = 'scoped memory for user_encoder_forward.1']
    #allocation13 [shape = 'u8[512]{0}', space=vmem, size = 0x400, scoped, tag = 'input window, operand 12, single buffered']
    #allocation14 [shape = 'u8[512]{0}', space=vmem, size = 0x400, scoped, tag = 'input window, operand 13, single buffered']
    #allocation15 [shape = 's32[1]{0}', space=sflag, size = 0x4, scoped, tag = 'scoped memory for user_encoder_forward.1']
    #allocation16 [shape = 'u8[16384]{0}', space=vmem, size = 0x4000, scoped, tag = 'input window, operand 15, single buffered']
    #allocation17 [shape = 'u8[16384]{0}', space=vmem, size = 0x4000, scoped, tag = 'input window, operand 16, single buffered']
    #allocation18 [shape = 's32[1]{0}', space=sflag, size = 0x4, scoped, tag = 'scoped memory for user_encoder_forward.1']
    #allocation19 [shape = 'u8[16384]{0}', space=vmem, size = 0x4000, scoped, tag = 'input window, operand 17, single buffered']
    #allocation20 [shape = 'u8[16384]{0}', space=vmem, size = 0x4000, scoped, tag = 'input window, operand 18, single buffered']
    #allocation21 [shape = 's32[1]{0}', space=sflag, size = 0x4, scoped, tag = 'scoped memory for user_encoder_forward.1']
    #allocation22 [shape = 'u8[16384]{0}', space=vmem, size = 0x4000, scoped, tag = 'input window, operand 19, single buffered']
    #allocation23 [shape = 'u8[512]{0}', space=vmem, size = 0x400, scoped, tag = 'input window, operand 20, single buffered']
    #allocation24 [shape = 's32[1]{0}', space=sflag, size = 0x4, scoped, tag = 'scoped memory for user_encoder_forward.1']
    #allocation25 [shape = 'u8[512]{0}', space=vmem, size = 0x400, scoped, tag = 'input window, operand 21, single buffered']
    #allocation26 [shape = 'u8[512]{0}', space=vmem, size = 0x400, scoped, tag = 'input window, operand 22, single buffered']
    #allocation27 [shape = 's32[1]{0}', space=sflag, size = 0x4, scoped, tag = 'scoped memory for user_encoder_forward.1']
    #allocation28 [shape = 'u8[512]{0}', space=vmem, size = 0x400, scoped, tag = 'input window, operand 23, single buffered']
    #allocation29 [shape = 'u8[512]{0}', space=vmem, size = 0x400, scoped, tag = 'input window, operand 25, single buffered']
    #allocation30 [shape = 's32[1]{0}', space=sflag, size = 0x4, scoped, tag = 'scoped memory for user_encoder_forward.1']
    #allocation31 [shape = 'u8[512]{0}', space=vmem, size = 0x400, scoped, tag = 'input window, operand 26, single buffered']
    #allocation32 [shape = 'u8[1024]{0}', space=vmem, size = 0x400, scoped, tag = 'output window, operand 0, single buffered']
    %32 = vsyncpa [#allocation3], 0
    %33 = vsyncpa [#allocation6], 0
    %34 = vsyncpa [#allocation9], 0
    %35 = vsyncpa [#allocation12], 0
    %36 = vsyncpa [#allocation15], 0
    %37 = vsyncpa [#allocation18], 0
    %38 = vsyncpa [#allocation21], 0
    %39 = vsyncpa [#allocation24], 0
    %40 = vsyncpa [#allocation27], 0
    %41 = vsyncpa [#allocation30], 0
    %42 = vsyncpa [#allocation4], 0
    // Predicated region
    $region2: #{user_encoder_forward.1} parent=1 // pred_check
      _
    $region3: #{user_encoder_forward.1} parent=1 // pred_check_branch
      %44 = sbr.rel (0) target = $region5
    $region4: #{user_encoder_forward.1} parent=1 // pred_region
      %46 = vsyncadd [#allocation3], 0
      %s47 = sshll.u32 %s0, 4
      %s48 = int_to_ptr.hbm [resolvable:$true] %s47
      %s49 = sshll.u32 [#allocation2], 4
      %s50 = int_to_ptr.vmem [resolvable:$true] %s49
      %55 = dma.hbm_to_vmem [thread:$0]  %s48, 256, %s50, [#allocation3], 128, 128, 8
    $region5: #{user_encoder_forward.1} parent=1 // pred_fallthru
      _
    // Predicated region
    $region6: #{user_encoder_forward.1} parent=1 // pred_check
      _
    $region7: #{user_encoder_forward.1} parent=1 // pred_check_branch
      %57 = sbr.rel (0) target = $region9
    $region8: #{user_encoder_forward.1} parent=1 // pred_region
      _
    $region9: #{user_encoder_forward.1} parent=1 // pred_fallthru
      _
    // Predicated region
    $region10: #{user_encoder_forward.1} parent=1 // pred_check
      _
    $region11: #{user_encoder_forward.1} parent=1 // pred_check_branch
      %59 = sbr.rel (0) target = $region13
    $region12: #{user_encoder_forward.1} parent=1 // pred_region
      _
    $region13: #{user_encoder_forward.1} parent=1 // pred_fallthru
      _
    // Predicated region
    $region14: #{user_encoder_forward.1} parent=1 // pred_check
      _
    $region15: #{user_encoder_forward.1} parent=1 // pred_check_branch
      %61 = sbr.rel (0) target = $region17
    $region16: #{user_encoder_forward.1} parent=1 // pred_region
      _
    $region17: #{user_encoder_forward.1} parent=1 // pred_fallthru
      _
    // Predicated region
    $region18: #{user_encoder_forward.1} parent=1 // pred_check
      _
    $region19: #{user_encoder_forward.1} parent=1 // pred_check_branch
      %63 = sbr.rel (0) target = $region21
    $region20: #{user_encoder_forward.1} parent=1 // pred_region
      %65 = vsyncadd [#allocation6], 0
      %s67 = sshll.u32 %s4, 4
      %s68 = int_to_ptr.hbm [resolvable:$true] %s67
      %s69 = sshll.u32 [#allocation5], 4
      %s70 = int_to_ptr.vmem [resolvable:$true] %s69
      %72 = dma.hbm_to_vmem [thread:$0]  %s68, 16, %s70, [#allocation6]
    $region21: #{user_encoder_forward.1} parent=1 // pred_fallthru
      _
    // Predicated region
    $region22: #{user_encoder_forward.1} parent=1 // pred_check
      _
    $region23: #{user_encoder_forward.1} parent=1 // pred_check_branch
      %74 = sbr.rel (0) target = $region25
    $region24: #{user_encoder_forward.1} parent=1 // pred_region
      _
    $region25: #{user_encoder_forward.1} parent=1 // pred_fallthru
      _
    // Predicated region
    $region26: #{user_encoder_forward.1} parent=1 // pred_check
      _
    $region27: #{user_encoder_forward.1} parent=1 // pred_check_branch
      %76 = sbr.rel (0) target = $region29
    $region28: #{user_encoder_forward.1} parent=1 // pred_region
      %78 = vsyncadd [#allocation6], 0
      %s80 = sshll.u32 %s6, 4
      %s81 = int_to_ptr.hbm [resolvable:$true] %s80
      %s82 = sshll.u32 [#allocation7], 4
      %s83 = int_to_ptr.vmem [resolvable:$true] %s82
      %85 = dma.hbm_to_vmem [thread:$0]  %s81, 16, %s83, [#allocation6]
    $region29: #{user_encoder_forward.1} parent=1 // pred_fallthru
      _
    // Predicated region
    $region30: #{user_encoder_forward.1} parent=1 // pred_check
      _
    $region31: #{user_encoder_forward.1} parent=1 // pred_check_branch
      %87 = sbr.rel (0) target = $region33
    $region32: #{user_encoder_forward.1} parent=1 // pred_region
      _
    $region33: #{user_encoder_forward.1} parent=1 // pred_fallthru
      _
    // Predicated region
    $region34: #{user_encoder_forward.1} parent=1 // pred_check
      _
    $region35: #{user_encoder_forward.1} parent=1 // pred_check_branch
      %89 = sbr.rel (0) target = $region37
    $region36: #{user_encoder_forward.1} parent=1 // pred_region
      %91 = vsyncadd [#allocation9], 0
      %s93 = sshll.u32 %s8, 4
      %s94 = int_to_ptr.hbm [resolvable:$true] %s93
      %s95 = sshll.u32 [#allocation8], 4
      %s96 = int_to_ptr.vmem [resolvable:$true] %s95
      %98 = dma.hbm_to_vmem [thread:$0]  %s94, 64, %s96, [#allocation9]
    $region37: #{user_encoder_forward.1} parent=1 // pred_fallthru
      _
    // Predicated region
    $region38: #{user_encoder_forward.1} parent=1 // pred_check
      _
    $region39: #{user_encoder_forward.1} parent=1 // pred_check_branch
      %100 = sbr.rel (0) target = $region41
    $region40: #{user_encoder_forward.1} parent=1 // pred_region
      %102 = vsyncadd [#allocation9], 0
      %s103 = sshll.u32 %s9, 4
      %s104 = int_to_ptr.hbm [resolvable:$true] %s103
      %s105 = sshll.u32 [#allocation10], 4
      %s106 = int_to_ptr.vmem [resolvable:$true] %s105
      %111 = dma.hbm_to_vmem [thread:$0]  %s104, 512, %s106, [#allocation9], 128, 128, 8
    $region41: #{user_encoder_forward.1} parent=1 // pred_fallthru
      _
    // Predicated region
    $region42: #{user_encoder_forward.1} parent=1 // pred_check
      _
    $region43: #{user_encoder_forward.1} parent=1 // pred_check_branch
      %113 = sbr.rel (0) target = $region45
    $region44: #{user_encoder_forward.1} parent=1 // pred_region
      %115 = vsyncadd [#allocation12], 0
      %s117 = sshll.u32 %s10, 4
      %s118 = int_to_ptr.hbm [resolvable:$true] %s117
      %s119 = sshll.u32 [#allocation11], 4
      %s120 = int_to_ptr.vmem [resolvable:$true] %s119
      %122 = dma.hbm_to_vmem [thread:$0]  %s118, 16, %s120, [#allocation12]
    $region45: #{user_encoder_forward.1} parent=1 // pred_fallthru
      _
    // Predicated region
    $region46: #{user_encoder_forward.1} parent=1 // pred_check
      _
    $region47: #{user_encoder_forward.1} parent=1 // pred_check_branch
      %124 = sbr.rel (0) target = $region49
    $region48: #{user_encoder_forward.1} parent=1 // pred_region
      _
    $region49: #{user_encoder_forward.1} parent=1 // pred_fallthru
      _
    // Predicated region
    $region50: #{user_encoder_forward.1} parent=1 // pred_check
      _
    $region51: #{user_encoder_forward.1} parent=1 // pred_check_branch
      %126 = sbr.rel (0) target = $region53
    $region52: #{user_encoder_forward.1} parent=1 // pred_region
      %128 = vsyncadd [#allocation12], 0
      %s130 = sshll.u32 %s12, 4
      %s131 = int_to_ptr.hbm [resolvable:$true] %s130
      %s132 = sshll.u32 [#allocation13], 4
      %s133 = int_to_ptr.vmem [resolvable:$true] %s132
      %135 = dma.hbm_to_vmem [thread:$0]  %s131, 16, %s133, [#allocation12]
    $region53: #{user_encoder_forward.1} parent=1 // pred_fallthru
      _
    // Predicated region
    $region54: #{user_encoder_forward.1} parent=1 // pred_check
      _
    $region55: #{user_encoder_forward.1} parent=1 // pred_check_branch
      %137 = sbr.rel (0) target = $region57
    $region56: #{user_encoder_forward.1} parent=1 // pred_region
      %139 = vsyncadd [#allocation15], 0
      %s141 = sshll.u32 %s13, 4
      %s142 = int_to_ptr.hbm [resolvable:$true] %s141
      %s143 = sshll.u32 [#allocation14], 4
      %s144 = int_to_ptr.vmem [resolvable:$true] %s143
      %146 = dma.hbm_to_vmem [thread:$0]  %s142, 16, %s144, [#allocation15]
    $region57: #{user_encoder_forward.1} parent=1 // pred_fallthru
      _
    // Predicated region
    $region58: #{user_encoder_forward.1} parent=1 // pred_check
      _
    $region59: #{user_encoder_forward.1} parent=1 // pred_check_branch
      %148 = sbr.rel (0) target = $region61
    $region60: #{user_encoder_forward.1} parent=1 // pred_region
      _
    $region61: #{user_encoder_forward.1} parent=1 // pred_fallthru
      _
    // Predicated region
    $region62: #{user_encoder_forward.1} parent=1 // pred_check
      _
    $region63: #{user_encoder_forward.1} parent=1 // pred_check_branch
      %150 = sbr.rel (0) target = $region65
    $region64: #{user_encoder_forward.1} parent=1 // pred_region
      %152 = vsyncadd [#allocation15], 0
      %s153 = sshll.u32 %s15, 4
      %s154 = int_to_ptr.hbm [resolvable:$true] %s153
      %s155 = sshll.u32 [#allocation16], 4
      %s156 = int_to_ptr.vmem [resolvable:$true] %s155
      %161 = dma.hbm_to_vmem [thread:$0]  %s154, 512, %s156, [#allocation15], 128, 128, 8
    $region65: #{user_encoder_forward.1} parent=1 // pred_fallthru
      _
    // Predicated region
    $region66: #{user_encoder_forward.1} parent=1 // pred_check
      _
    $region67: #{user_encoder_forward.1} parent=1 // pred_check_branch
      %163 = sbr.rel (0) target = $region69
    $region68: #{user_encoder_forward.1} parent=1 // pred_region
      %165 = vsyncadd [#allocation18], 0
      %s166 = sshll.u32 %s16, 4
      %s167 = int_to_ptr.hbm [resolvable:$true] %s166
      %s168 = sshll.u32 [#allocation17], 4
      %s169 = int_to_ptr.vmem [resolvable:$true] %s168
      %174 = dma.hbm_to_vmem [thread:$0]  %s167, 512, %s169, [#allocation18], 128, 128, 8
    $region69: #{user_encoder_forward.1} parent=1 // pred_fallthru
      _
    // Predicated region
    $region70: #{user_encoder_forward.1} parent=1 // pred_check
      _
    $region71: #{user_encoder_forward.1} parent=1 // pred_check_branch
      %176 = sbr.rel (0) target = $region73
    $region72: #{user_encoder_forward.1} parent=1 // pred_region
      %178 = vsyncadd [#allocation18], 0
      %s179 = sshll.u32 %s17, 4
      %s180 = int_to_ptr.hbm [resolvable:$true] %s179
      %s181 = sshll.u32 [#allocation19], 4
      %s182 = int_to_ptr.vmem [resolvable:$true] %s181
      %187 = dma.hbm_to_vmem [thread:$0]  %s180, 512, %s182, [#allocation18], 128, 128, 8
    $region73: #{user_encoder_forward.1} parent=1 // pred_fallthru
      _
    // Predicated region
    $region74: #{user_encoder_forward.1} parent=1 // pred_check
      _
    $region75: #{user_encoder_forward.1} parent=1 // pred_check_branch
      %189 = sbr.rel (0) target = $region77
    $region76: #{user_encoder_forward.1} parent=1 // pred_region
      %191 = vsyncadd [#allocation21], 0
      %s192 = sshll.u32 %s18, 4
      %s193 = int_to_ptr.hbm [resolvable:$true] %s192
      %s194 = sshll.u32 [#allocation20], 4
      %s195 = int_to_ptr.vmem [resolvable:$true] %s194
      %200 = dma.hbm_to_vmem [thread:$0]  %s193, 512, %s195, [#allocation21], 128, 128, 8
    $region77: #{user_encoder_forward.1} parent=1 // pred_fallthru
      _
    // Predicated region
    $region78: #{user_encoder_forward.1} parent=1 // pred_check
      _
    $region79: #{user_encoder_forward.1} parent=1 // pred_check_branch
      %202 = sbr.rel (0) target = $region81
    $region80: #{user_encoder_forward.1} parent=1 // pred_region
      %204 = vsyncadd [#allocation21], 0
      %s205 = sshll.u32 %s19, 4
      %s206 = int_to_ptr.hbm [resolvable:$true] %s205
      %s207 = sshll.u32 [#allocation22], 4
      %s208 = int_to_ptr.vmem [resolvable:$true] %s207
      %213 = dma.hbm_to_vmem [thread:$0]  %s206, 512, %s208, [#allocation21], 128, 128, 8
    $region81: #{user_encoder_forward.1} parent=1 // pred_fallthru
      _
    // Predicated region
    $region82: #{user_encoder_forward.1} parent=1 // pred_check
      _
    $region83: #{user_encoder_forward.1} parent=1 // pred_check_branch
      %215 = sbr.rel (0) target = $region85
    $region84: #{user_encoder_forward.1} parent=1 // pred_region
      %217 = vsyncadd [#allocation24], 0
      %s219 = sshll.u32 %s20, 4
      %s220 = int_to_ptr.hbm [resolvable:$true] %s219
      %s221 = sshll.u32 [#allocation23], 4
      %s222 = int_to_ptr.vmem [resolvable:$true] %s221
      %224 = dma.hbm_to_vmem [thread:$0]  %s220, 16, %s222, [#allocation24]
    $region85: #{user_encoder_forward.1} parent=1 // pred_fallthru
      _
    // Predicated region
    $region86: #{user_encoder_forward.1} parent=1 // pred_check
      _
    $region87: #{user_encoder_forward.1} parent=1 // pred_check_branch
      %226 = sbr.rel (0) target = $region89
    $region88: #{user_encoder_forward.1} parent=1 // pred_region
      %228 = vsyncadd [#allocation24], 0
      %s230 = sshll.u32 %s21, 4
      %s231 = int_to_ptr.hbm [resolvable:$true] %s230
      %s232 = sshll.u32 [#allocation25], 4
      %s233 = int_to_ptr.vmem [resolvable:$true] %s232
      %235 = dma.hbm_to_vmem [thread:$0]  %s231, 16, %s233, [#allocation24]
    $region89: #{user_encoder_forward.1} parent=1 // pred_fallthru
      _
    // Predicated region
    $region90: #{user_encoder_forward.1} parent=1 // pred_check
      _
    $region91: #{user_encoder_forward.1} parent=1 // pred_check_branch
      %237 = sbr.rel (0) target = $region93
    $region92: #{user_encoder_forward.1} parent=1 // pred_region
      %239 = vsyncadd [#allocation27], 0
      %s241 = sshll.u32 %s22, 4
      %s242 = int_to_ptr.hbm [resolvable:$true] %s241
      %s243 = sshll.u32 [#allocation26], 4
      %s244 = int_to_ptr.vmem [resolvable:$true] %s243
      %246 = dma.hbm_to_vmem [thread:$0]  %s242, 16, %s244, [#allocation27]
    $region93: #{user_encoder_forward.1} parent=1 // pred_fallthru
      _
    // Predicated region
    $region94: #{user_encoder_forward.1} parent=1 // pred_check
      _
    $region95: #{user_encoder_forward.1} parent=1 // pred_check_branch
      %248 = sbr.rel (0) target = $region97
    $region96: #{user_encoder_forward.1} parent=1 // pred_region
      %250 = vsyncadd [#allocation27], 0
      %s252 = sshll.u32 %s23, 4
      %s253 = int_to_ptr.hbm [resolvable:$true] %s252
      %s254 = sshll.u32 [#allocation28], 4
      %s255 = int_to_ptr.vmem [resolvable:$true] %s254
      %257 = dma.hbm_to_vmem [thread:$0]  %s253, 16, %s255, [#allocation27]
    $region97: #{user_encoder_forward.1} parent=1 // pred_fallthru
      _
    // Predicated region
    $region98: #{user_encoder_forward.1} parent=1 // pred_check
      _
    $region99: #{user_encoder_forward.1} parent=1 // pred_check_branch
      %259 = sbr.rel (0) target = $region101
    $region100: #{user_encoder_forward.1} parent=1 // pred_region
      _
    $region101: #{user_encoder_forward.1} parent=1 // pred_fallthru
      _
    // Predicated region
    $region102: #{user_encoder_forward.1} parent=1 // pred_check
      _
    $region103: #{user_encoder_forward.1} parent=1 // pred_check_branch
      %261 = sbr.rel (0) target = $region105
    $region104: #{user_encoder_forward.1} parent=1 // pred_region
      %263 = vsyncadd [#allocation30], 0
      %s265 = sshll.u32 %s25, 4
      %s266 = int_to_ptr.hbm [resolvable:$true] %s265
      %s267 = sshll.u32 [#allocation29], 4
      %s268 = int_to_ptr.vmem [resolvable:$true] %s267
      %270 = dma.hbm_to_vmem [thread:$0]  %s266, 16, %s268, [#allocation30]
    $region105: #{user_encoder_forward.1} parent=1 // pred_fallthru
      _
    // Predicated region
    $region106: #{user_encoder_forward.1} parent=1 // pred_check
      _
    $region107: #{user_encoder_forward.1} parent=1 // pred_check_branch
      %272 = sbr.rel (0) target = $region109
    $region108: #{user_encoder_forward.1} parent=1 // pred_region
      %274 = vsyncadd [#allocation30], 0
      %s276 = sshll.u32 %s26, 4
      %s277 = int_to_ptr.hbm [resolvable:$true] %s276
      %s278 = sshll.u32 [#allocation31], 4
      %s279 = int_to_ptr.vmem [resolvable:$true] %s278
      %281 = dma.hbm_to_vmem [thread:$0]  %s277, 16, %s279, [#allocation30]
    $region109: #{user_encoder_forward.1} parent=1 // pred_fallthru
      _
    // Predicated region
    $region110: #{user_encoder_forward.1} parent=1 // pred_check
      _
    $region111: #{user_encoder_forward.1} parent=1 // pred_check_branch
      %283 = sbr.rel (0) target = $region113
    $region112: #{user_encoder_forward.1} parent=1 // pred_region
      %285 = dma.done [#allocation3], 256
    $region113: #{user_encoder_forward.1} parent=1 // pred_fallthru
      _
    // Predicated region
    $region114: #{user_encoder_forward.1} parent=1 // pred_check
      _
    $region115: #{user_encoder_forward.1} parent=1 // pred_check_branch
      %287 = sbr.rel (0) target = $region117
    $region116: #{user_encoder_forward.1} parent=1 // pred_region
      %289 = dma.done [#allocation6], 16
    $region117: #{user_encoder_forward.1} parent=1 // pred_fallthru
      _
    // Predicated region
    $region118: #{user_encoder_forward.1} parent=1 // pred_check
      _
    $region119: #{user_encoder_forward.1} parent=1 // pred_check_branch
      %291 = sbr.rel (0) target = $region121
    $region120: #{user_encoder_forward.1} parent=1 // pred_region
      %293 = dma.done [#allocation6], 16
    $region121: #{user_encoder_forward.1} parent=1 // pred_fallthru
      _
    // Predicated region
    $region122: #{user_encoder_forward.1} parent=1 // pred_check
      _
    $region123: #{user_encoder_forward.1} parent=1 // pred_check_branch
      %295 = sbr.rel (0) target = $region125
    $region124: #{user_encoder_forward.1} parent=1 // pred_region
      %297 = dma.done [#allocation9], 64
    $region125: #{user_encoder_forward.1} parent=1 // pred_fallthru
      _
    // Predicated region
    $region126: #{user_encoder_forward.1} parent=1 // pred_check
      _
    $region127: #{user_encoder_forward.1} parent=1 // pred_check_branch
      %299 = sbr.rel (0) target = $region129
    $region128: #{user_encoder_forward.1} parent=1 // pred_region
      %301 = dma.done [#allocation9], 512
    $region129: #{user_encoder_forward.1} parent=1 // pred_fallthru
      _
    // Predicated region
    $region130: #{user_encoder_forward.1} parent=1 // pred_check
      _
    $region131: #{user_encoder_forward.1} parent=1 // pred_check_branch
      %303 = sbr.rel (0) target = $region133
    $region132: #{user_encoder_forward.1} parent=1 // pred_region
      %305 = dma.done [#allocation12], 16
    $region133: #{user_encoder_forward.1} parent=1 // pred_fallthru
      _
    // Predicated region
    $region134: #{user_encoder_forward.1} parent=1 // pred_check
      _
    $region135: #{user_encoder_forward.1} parent=1 // pred_check_branch
      %307 = sbr.rel (0) target = $region137
    $region136: #{user_encoder_forward.1} parent=1 // pred_region
      %309 = dma.done [#allocation12], 16
    $region137: #{user_encoder_forward.1} parent=1 // pred_fallthru
      _
    // Predicated region
    $region138: #{user_encoder_forward.1} parent=1 // pred_check
      _
    $region139: #{user_encoder_forward.1} parent=1 // pred_check_branch
      %311 = sbr.rel (0) target = $region141
    $region140: #{user_encoder_forward.1} parent=1 // pred_region
      %313 = dma.done [#allocation15], 16
    $region141: #{user_encoder_forward.1} parent=1 // pred_fallthru
      _
    // Predicated region
    $region142: #{user_encoder_forward.1} parent=1 // pred_check
      _
    $region143: #{user_encoder_forward.1} parent=1 // pred_check_branch
      %315 = sbr.rel (0) target = $region145
    $region144: #{user_encoder_forward.1} parent=1 // pred_region
      %317 = dma.done [#allocation15], 512
    $region145: #{user_encoder_forward.1} parent=1 // pred_fallthru
      _
    // Predicated region
    $region146: #{user_encoder_forward.1} parent=1 // pred_check
      _
    $region147: #{user_encoder_forward.1} parent=1 // pred_check_branch
      %319 = sbr.rel (0) target = $region149
    $region148: #{user_encoder_forward.1} parent=1 // pred_region
      %321 = dma.done [#allocation18], 512
    $region149: #{user_encoder_forward.1} parent=1 // pred_fallthru
      _
    // Predicated region
    $region150: #{user_encoder_forward.1} parent=1 // pred_check
      _
    $region151: #{user_encoder_forward.1} parent=1 // pred_check_branch
      %323 = sbr.rel (0) target = $region153
    $region152: #{user_encoder_forward.1} parent=1 // pred_region
      %325 = dma.done [#allocation18], 512
    $region153: #{user_encoder_forward.1} parent=1 // pred_fallthru
      _
    // Predicated region
    $region154: #{user_encoder_forward.1} parent=1 // pred_check
      _
    $region155: #{user_encoder_forward.1} parent=1 // pred_check_branch
      %327 = sbr.rel (0) target = $region157
    $region156: #{user_encoder_forward.1} parent=1 // pred_region
      %329 = dma.done [#allocation21], 512
    $region157: #{user_encoder_forward.1} parent=1 // pred_fallthru
      _
    // Predicated region
    $region158: #{user_encoder_forward.1} parent=1 // pred_check
      _
    $region159: #{user_encoder_forward.1} parent=1 // pred_check_branch
      %331 = sbr.rel (0) target = $region161
    $region160: #{user_encoder_forward.1} parent=1 // pred_region
      %333 = dma.done [#allocation21], 512
    $region161: #{user_encoder_forward.1} parent=1 // pred_fallthru
      _
    // Predicated region
    $region162: #{user_encoder_forward.1} parent=1 // pred_check
      _
    $region163: #{user_encoder_forward.1} parent=1 // pred_check_branch
      %335 = sbr.rel (0) target = $region165
    $region164: #{user_encoder_forward.1} parent=1 // pred_region
      %337 = dma.done [#allocation24], 16
    $region165: #{user_encoder_forward.1} parent=1 // pred_fallthru
      _
    // Predicated region
    $region166: #{user_encoder_forward.1} parent=1 // pred_check
      _
    $region167: #{user_encoder_forward.1} parent=1 // pred_check_branch
      %339 = sbr.rel (0) target = $region169
    $region168: #{user_encoder_forward.1} parent=1 // pred_region
      %341 = dma.done [#allocation24], 16
    $region169: #{user_encoder_forward.1} parent=1 // pred_fallthru
      _
    // Predicated region
    $region170: #{user_encoder_forward.1} parent=1 // pred_check
      _
    $region171: #{user_encoder_forward.1} parent=1 // pred_check_branch
      %343 = sbr.rel (0) target = $region173
    $region172: #{user_encoder_forward.1} parent=1 // pred_region
      %345 = dma.done [#allocation27], 16
    $region173: #{user_encoder_forward.1} parent=1 // pred_fallthru
      _
    // Predicated region
    $region174: #{user_encoder_forward.1} parent=1 // pred_check
      _
    $region175: #{user_encoder_forward.1} parent=1 // pred_check_branch
      %347 = sbr.rel (0) target = $region177
    $region176: #{user_encoder_forward.1} parent=1 // pred_region
      %349 = dma.done [#allocation27], 16
    $region177: #{user_encoder_forward.1} parent=1 // pred_fallthru
      _
    // Predicated region
    $region178: #{user_encoder_forward.1} parent=1 // pred_check
      _
    $region179: #{user_encoder_forward.1} parent=1 // pred_check_branch
      %351 = sbr.rel (0) target = $region181
    $region180: #{user_encoder_forward.1} parent=1 // pred_region
      %353 = dma.done [#allocation30], 16
    $region181: #{user_encoder_forward.1} parent=1 // pred_fallthru
      _
    // Predicated region
    $region182: #{user_encoder_forward.1} parent=1 // pred_check
      _
    $region183: #{user_encoder_forward.1} parent=1 // pred_check_branch
      %355 = sbr.rel (0) target = $region185
    $region184: #{user_encoder_forward.1} parent=1 // pred_region
      %357 = dma.done [#allocation30], 16
    $region185: #{user_encoder_forward.1} parent=1 // pred_fallthru
      _
    %v358 = vld [vmem:[#allocation2] sm:$0xff]
    %v359 = vld [vmem:[#allocation2 + $0x8] sm:$0xff]
    %v360 = vld [vmem:[%s1] sm:$0xff]
    %v361 = vld [vmem:[%s1 + $0x8] sm:$0xff]
    %v362 = vld [vmem:[%s1 + $0x10] sm:$0xff]
    %v363 = vld [vmem:[%s1 + $0x18] sm:$0xff]
    %v364 = vld [vmem:[%s2] sm:$0x1]
    %v366 = vperm.slane %v364, 0
    %vm368 = vcmask 261120
    %v370 = vsel %vm368, %v358, 0
    %v373 = vsel %vm368, %v359, 0
    %375 = vmatpush.msra.mxu0 0.0
    %376 = vmatpush.msra.mxu0 0.0
    %377 = vmatpush.msra.mxu0 0.0
    %378 = vmatpush.msra.mxu0 0.0
    %379 = vmatpush.msra.mxu0 0.0
    %380 = vmatpush.msra.mxu0 0.0
    %381 = vmatpush.msra.mxu0 0.0
    %382 = vmatpush.msra.mxu0 0.0
    %383 = vmatpush.msra.mxu0 0.0
    %384 = vmatpush.msra.mxu0 0.0
    %385 = vmatpush.msra.mxu0 0.0
    %386 = vmatpush.msra.mxu0 0.0
    %387 = vmatpush.msra.mxu0 %v363
    %388 = vmatpush.msra.mxu0 %v362
    %389 = vmatpush.msra.mxu0 %v361
    %390 = vmatpush.msra.mxu0 %v360
    %391 = vmatmul.f32.gmra.mxu0 %v370
    %v392 = vpop.f32.mrf.mxu0
    %v393 = vadd.f32 %v366, %v392
    %394 = vmatmul.f32.gmra.mxu0 %v373
    %v395 = vpop.f32.mrf.mxu0
    %v396 = vadd.f32 %v366, %v395
    %397 = vdwg.mxu0
    %v398 = vld [vmem:[%s3] sm:$0xff]
    %v399 = vld [vmem:[%s3 + $0x8] sm:$0xff]
    %v400 = vld [vmem:[%s3 + $0x10] sm:$0xff]
    %v401 = vld [vmem:[%s3 + $0x18] sm:$0xff]
    %v402 = vld [vmem:[#allocation5] sm:$0x1]
    %v404 = vperm.slane %v402, 0
    %406 = vmatpush.msra.mxu0 0.0
    %407 = vmatpush.msra.mxu0 0.0
    %408 = vmatpush.msra.mxu0 0.0
    %409 = vmatpush.msra.mxu0 0.0
    %410 = vmatpush.msra.mxu0 0.0
    %411 = vmatpush.msra.mxu0 0.0
    %412 = vmatpush.msra.mxu0 0.0
    %413 = vmatpush.msra.mxu0 0.0
    %414 = vmatpush.msra.mxu0 0.0
    %415 = vmatpush.msra.mxu0 0.0
    %416 = vmatpush.msra.mxu0 0.0
    %417 = vmatpush.msra.mxu0 0.0
    %418 = vmatpush.msra.mxu0 %v401
    %419 = vmatpush.msra.mxu0 %v400
    %420 = vmatpush.msra.mxu0 %v399
    %421 = vmatpush.msra.mxu0 %v398
    %422 = vmatmul.f32.gmra.mxu0 %v370
    %v423 = vpop.f32.mrf.mxu0
    %v424 = vadd.f32 %v404, %v423
    %425 = vmatmul.f32.gmra.mxu0 %v373
    %v426 = vpop.f32.mrf.mxu0
    %v427 = vadd.f32 %v404, %v426
    %428 = vdwg.mxu0
    %v429 = vld [vmem:[%s5] sm:$0xff]
    %v430 = vld [vmem:[%s5 + $0x8] sm:$0xff]
    %v431 = vld [vmem:[%s5 + $0x10] sm:$0xff]
    %v432 = vld [vmem:[%s5 + $0x18] sm:$0xff]
    %v433 = vld [vmem:[#allocation7] sm:$0x1]
    %v435 = vperm.slane %v433, 0
    %437 = vmatpush.msra.mxu0 0.0
    %438 = vmatpush.msra.mxu0 0.0
    %439 = vmatpush.msra.mxu0 0.0
    %440 = vmatpush.msra.mxu0 0.0
    %441 = vmatpush.msra.mxu0 0.0
    %442 = vmatpush.msra.mxu0 0.0
    %443 = vmatpush.msra.mxu0 0.0
    %444 = vmatpush.msra.mxu0 0.0
    %445 = vmatpush.msra.mxu0 0.0
    %446 = vmatpush.msra.mxu0 0.0
    %447 = vmatpush.msra.mxu0 0.0
    %448 = vmatpush.msra.mxu0 0.0
    %449 = vmatpush.msra.mxu0 %v432
    %450 = vmatpush.msra.mxu0 %v431
    %451 = vmatpush.msra.mxu0 %v430
    %452 = vmatpush.msra.mxu0 %v429
    %453 = vmatmul.f32.gmra.mxu0 %v370
    %v454 = vpop.f32.mrf.mxu0
    %v455 = vadd.f32 %v435, %v454
    %456 = vmatmul.f32.gmra.mxu0 %v373
    %v457 = vpop.f32.mrf.mxu0
    %v458 = vadd.f32 %v435, %v457
    %459 = vdwg.mxu0
    %v460 = vld [vmem:[%s7] sm:$0xff]
    %v461 = vld [vmem:[%s7 + $0x8] sm:$0xff]
    %v462 = vld [vmem:[%s7 + $0x10] sm:$0xff]
    %v463 = vld [vmem:[%s7 + $0x18] sm:$0xff]
    %v464 = vld [vmem:[#allocation8] sm:$0xf]
    %v465 = vmul.f32 %v393, %v424
    %v466 = vmul.f32 %v396, %v424
    %v468 = vsel %vm368, %v465, 0
    %v471 = vsel %vm368, %v466, 0
    %473 = vmatpush.msra.mxu0 0.0
    %474 = vmatpush.msra.mxu0 0.0
    %475 = vmatpush.msra.mxu0 0.0
    %476 = vmatpush.msra.mxu0 0.0
    %477 = vmatpush.msra.mxu0 0.0
    %478 = vmatpush.msra.mxu0 0.0
    %479 = vmatpush.msra.mxu0 0.0
    %480 = vmatpush.msra.mxu0 0.0
    %481 = vmatpush.msra.mxu0 0.0
    %482 = vmatpush.msra.mxu0 0.0
    %483 = vmatpush.msra.mxu0 0.0
    %484 = vmatpush.msra.mxu0 0.0
    %485 = vmatpush.msra.mxu0 %v463
    %486 = vmatpush.msra.mxu0 %v462
    %487 = vmatpush.msra.mxu0 %v461
    %488 = vmatpush.msra.mxu0 %v460
    %489 = vmatmul.f32.gmra.mxu0 %v468
    %v490 = vpop.f32.mrf.mxu0
    %v491 = vadd.f32 0.0, %v490
    %492 = vmatmul.f32.gmra.mxu0 %v471
    %v493 = vpop.f32.mrf.mxu0
    %v494 = vadd.f32 0.0, %v493
    %495 = vdwg.mxu0
    %v496 = vmul.f32 %v393, %v427
    %v497 = vmul.f32 %v396, %v427
    %v499 = vsel %vm368, %v496, 0
    %v502 = vsel %vm368, %v497, 0
    %504 = vmatpush.msra.mxu0 0.0
    %505 = vmatpush.msra.mxu0 0.0
    %506 = vmatpush.msra.mxu0 0.0
    %507 = vmatpush.msra.mxu0 0.0
    %508 = vmatpush.msra.mxu0 0.0
    %509 = vmatpush.msra.mxu0 0.0
    %510 = vmatpush.msra.mxu0 0.0
    %511 = vmatpush.msra.mxu0 0.0
    %512 = vmatpush.msra.mxu0 0.0
    %513 = vmatpush.msra.mxu0 0.0
    %514 = vmatpush.msra.mxu0 0.0
    %515 = vmatpush.msra.mxu0 0.0
    %516 = vmatpush.msra.mxu0 %v463
    %517 = vmatpush.msra.mxu0 %v462
    %518 = vmatpush.msra.mxu0 %v461
    %519 = vmatpush.msra.mxu0 %v460
    %520 = vmatmul.f32.gmra.mxu0 %v499
    %v521 = vpop.f32.mrf.mxu0
    %v522 = vadd.f32 0.0, %v521
    %523 = vmatmul.f32.gmra.mxu0 %v502
    %v524 = vpop.f32.mrf.mxu0
    %v525 = vadd.f32 0.0, %v524
    %526 = vdwg.mxu0
    %v527 = vmax.f32 %v491, %v522
    %v528 = vmax.f32 %v494, %v525
    %v529 = vsub.f32 %v491, %v527
    %v530 = vsub.f32 %v494, %v528
    %v531 = vmul.f32 %v529, 1.442695
    %v532 = vpow.pop %v531
    %v533 = vmul.f32 %v530, 1.442695
    %v534 = vpow.pop %v533
    %v535 = vsub.f32 %v522, %v527
    %v536 = vsub.f32 %v525, %v528
    %v537 = vmul.f32 %v535, 1.442695
    %v538 = vpow.pop %v537
    %v539 = vmul.f32 %v536, 1.442695
    %v540 = vpow.pop %v539
    %v541 = vadd.f32 %v532, %v538
    %v542 = vadd.f32 %v534, %v540
    %v543 = vrcp.pop %v541
    %v544 = vrcp.pop %v542
    %v545 = vmul.f32 %v532, %v543
    %v546 = vmul.f32 %v534, %v544
    %vm547 = vcmask 31744
    %v549 = vsel %vm547, %v545, 0
    %v552 = vsel %vm547, %v546, 0
    %vm554 = vcmask 1043456
    %v556 = vsel %vm554, %v464, 0
    %558 = vmatpush.msra.mxu0 0.0
    %559 = vmatpush.msra.mxu0 0.0
    %560 = vmatpush.msra.mxu0 0.0
    %561 = vmatpush.msra.mxu0 0.0
    %562 = vmatpush.msra.mxu0 0.0
    %563 = vmatpush.msra.mxu0 0.0
    %564 = vmatpush.msra.mxu0 0.0
    %565 = vmatpush.msra.mxu0 0.0
    %566 = vmatpush.msra.mxu0 0.0
    %567 = vmatpush.msra.mxu0 0.0
    %568 = vmatpush.msra.mxu0 0.0
    %569 = vmatpush.msra.mxu0 0.0
    %570 = vmatpush.msra.mxu0 0.0
    %571 = vmatpush.msra.mxu0 0.0
    %572 = vmatpush.msra.mxu0 0.0
    %573 = vmatpush.msra.mxu0 %v556
    %574 = vmatmul.f32.gmra.mxu0 %v549
    %v575 = vpop.f32.mrf.mxu0
    %v576 = vadd.f32 0.0, %v575
    %577 = vmatmul.f32.gmra.mxu0 %v552
    %v578 = vpop.f32.mrf.mxu0
    %v579 = vadd.f32 0.0, %v578
    %580 = vdwg.mxu0
    %v581 = vmul.f32 %v576, %v455
    %v582 = vmul.f32 %v579, %v455
    %v583 = vmul.f32 %v538, %v543
    %v584 = vmul.f32 %v540, %v544
    %v586 = vsel %vm547, %v583, 0
    %v589 = vsel %vm547, %v584, 0
    %591 = vmatpush.msra.mxu0 0.0
    %592 = vmatpush.msra.mxu0 0.0
    %593 = vmatpush.msra.mxu0 0.0
    %594 = vmatpush.msra.mxu0 0.0
    %595 = vmatpush.msra.mxu0 0.0
    %596 = vmatpush.msra.mxu0 0.0
    %597 = vmatpush.msra.mxu0 0.0
    %598 = vmatpush.msra.mxu0 0.0
    %599 = vmatpush.msra.mxu0 0.0
    %600 = vmatpush.msra.mxu0 0.0
    %601 = vmatpush.msra.mxu0 0.0
    %602 = vmatpush.msra.mxu0 0.0
    %603 = vmatpush.msra.mxu0 0.0
    %604 = vmatpush.msra.mxu0 0.0
    %605 = vmatpush.msra.mxu0 0.0
    %606 = vmatpush.msra.mxu0 %v556
    %607 = vmatmul.f32.gmra.mxu0 %v586
    %v608 = vpop.f32.mrf.mxu0
    %v609 = vadd.f32 0.0, %v608
    %610 = vmatmul.f32.gmra.mxu0 %v589
    %v611 = vpop.f32.mrf.mxu0
    %v612 = vadd.f32 0.0, %v611
    %613 = vdwg.mxu0
    %v614 = vmul.f32 %v609, %v458
    %v615 = vmul.f32 %v612, %v458
    %v616 = vadd.f32 %v581, %v614
    %v617 = vadd.f32 %v582, %v615
    %v618 = vld [vmem:[%s11] sm:$0xff]
    %v619 = vld [vmem:[%s11 + $0x8] sm:$0xff]
    %v620 = vld [vmem:[%s11 + $0x10] sm:$0xff]
    %v621 = vld [vmem:[%s11 + $0x18] sm:$0xff]
    %v622 = vld [vmem:[#allocation13] sm:$0x1]
    %v624 = vperm.slane %v622, 0
    %v627 = vsel %vm368, %v616, 0
    %v630 = vsel %vm368, %v617, 0
    %632 = vmatpush.msra.mxu0 0.0
    %633 = vmatpush.msra.mxu0 0.0
    %634 = vmatpush.msra.mxu0 0.0
    %635 = vmatpush.msra.mxu0 0.0
    %636 = vmatpush.msra.mxu0 0.0
    %637 = vmatpush.msra.mxu0 0.0
    %638 = vmatpush.msra.mxu0 0.0
    %639 = vmatpush.msra.mxu0 0.0
    %640 = vmatpush.msra.mxu0 0.0
    %641 = vmatpush.msra.mxu0 0.0
    %642 = vmatpush.msra.mxu0 0.0
    %643 = vmatpush.msra.mxu0 0.0
    %644 = vmatpush.msra.mxu0 %v621
    %645 = vmatpush.msra.mxu0 %v620
    %646 = vmatpush.msra.mxu0 %v619
    %647 = vmatpush.msra.mxu0 %v618
    %648 = vmatmul.f32.gmra.mxu0 %v627
    %v649 = vpop.f32.mrf.mxu0
    %v650 = vadd.f32 %v624, %v649
    %651 = vmatmul.f32.gmra.mxu0 %v630
    %v652 = vpop.f32.mrf.mxu0
    %v653 = vadd.f32 %v624, %v652
    %654 = vdwg.mxu0
    %v655 = vtanh.pop %v650
    %v656 = vtanh.pop %v653
    %v657 = vld [vmem:[#allocation14] sm:$0x1]
    %v659 = vperm.slane %v657, 0
    %v661 = vmul.f32 %v655, %v659
    %v662 = vmul.f32 %v656, %v659
    %vm663 = vcmask 130048
    %v664 = vsel %vm663, %v661, 0.0
    %665 = vadd.xlane.f32.xlu0 %v664
    %v666 = vpop.xlane.xlu0 %665
    %v667 = vsel %vm663, %v662, 0.0
    %668 = vadd.xlane.f32.xlu0 %v667
    %v669 = vpop.xlane.xlu0 %668
    %v672 = vlaneseq
    %v673 = vand.u32 %v672, 127
    %v674 = vperm.slane %v666, %v673
    %v675 = vperm.slane %v669, %v673
    %vm676 = vcmask 1041409
    %v677 = vsel %vm676, %v675, %v674
    %vm679 = vcmask 58368
    %v680 = vsel %vm679, %v677, -inf
    %681 = vmax.xlane.f32.xlu0 %v680
    %v682 = vpop.xlane.xlu0 %681
    %v684 = vperm.slane %v682, 0
    %v685 = vperm.slane %v682, 1
    %v688 = vsub.f32 %v666, %v684
    %v689 = vsub.f32 %v669, %v685
    %v690 = vmul.f32 %v688, 1.442695
    %v691 = vpow.pop %v690
    %v692 = vmul.f32 %v689, 1.442695
    %v693 = vpow.pop %v692
    %696 = vset.pattern.permute.xlu0 0
    %697 = vperm.xlu0 %696, %v691
    %v698 = vpop.permute.xlu0 %697
    %699 = vset.pattern.permute.xlu0 0
    %700 = vperm.xlu0 %699, %v693
    %v701 = vpop.permute.xlu0 %700
    %v702 = vperm.slane %v698, %v673
    %v703 = vperm.slane %v701, %v673
    %v704 = vsel %vm676, %v703, %v702
    %v706 = vsel %vm679, %v704, 0.0
    %707 = vadd.xlane.f32.xlu0 %v706
    %v708 = vpop.xlane.xlu0 %707
    %v710 = vperm.slane %v708, 0
    %v711 = vperm.slane %v708, 1
    %v714 = vrcp.pop %v710
    %v715 = vmul.f32 %v710, %v714
    %v716 = vsub.f32 1.0, %v715
    %v717 = vmul.f32 %v714, %v716
    %v718 = vadd.f32 %v714, %v717
    %vm719 = vweird.f32 %v710
    %vm720 = vweird.f32 %v714
    %vm721 = vmor %vm719, %vm720
    %v722 = vsel %vm721, %v714, %v718
    %v723 = vand.u32 2147483647, %v710
    %vm724 = vcmp.eq.f32.partialorder %v723, 8.507059e+37
    %v725 = vand.u32 %v710, 2147483648
    %v726 = vor.u32 1.1754944e-38, %v725
    %v727 = vsel %vm724, %v726, %v722
    %v728 = vmul.f32 %v691, %v727
    %v729 = vrcp.pop %v711
    %v730 = vmul.f32 %v711, %v729
    %v731 = vsub.f32 1.0, %v730
    %v732 = vmul.f32 %v729, %v731
    %v733 = vadd.f32 %v729, %v732
    %vm734 = vweird.f32 %v711
    %vm735 = vweird.f32 %v729
    %vm736 = vmor %vm734, %vm735
    %v737 = vsel %vm736, %v729, %v733
    %v738 = vand.u32 2147483647, %v711
    %vm739 = vcmp.eq.f32.partialorder %v738, 8.507059e+37
    %v740 = vand.u32 %v711, 2147483648
    %v741 = vor.u32 1.1754944e-38, %v740
    %v742 = vsel %vm739, %v741, %v737
    %v743 = vmul.f32 %v693, %v742
    %745 = vset.pattern.permute.xlu0 0
    %746 = vperm.xlu0 %745, %v728
    %v747 = vpop.permute.xlu0 %746
    %750 = vset.pattern.permute.xlu0 0
    %751 = vperm.xlu0 %750, %v743
    %v752 = vpop.permute.xlu0 %751
    %v754 = vmul.f32 %v747, %v616
    %v755 = vmul.f32 %v752, %v617
    %v756 = vsel %vm368, %v754, 0.0
    %v757 = vrot.slane %v756, 4
    %v758 = vadd.f32 %v756, %v757
    %v759 = vrot.slane %v758, 2
    %v760 = vadd.f32 %v758, %v759
    %v761 = vrot.slane %v760, 1
    %v762 = vadd.f32 %v760, %v761
    %v763 = vsel %vm368, %v755, 0.0
    %v764 = vrot.slane %v763, 4
    %v765 = vadd.f32 %v763, %v764
    %v766 = vrot.slane %v765, 2
    %v767 = vadd.f32 %v765, %v766
    %v768 = vrot.slane %v767, 1
    %v769 = vadd.f32 %v767, %v768
    %v770 = vld [vmem:[#allocation10] sm:$0xff]
    %v771 = vld [vmem:[#allocation10 + $0x8] sm:$0xff]
    %v772 = vld [vmem:[#allocation10 + $0x10] sm:$0xff]
    %v773 = vld [vmem:[#allocation10 + $0x18] sm:$0xff]
    %v774 = vld [vmem:[#allocation11] sm:$0x1]
    %v776 = vperm.slane %v774, 0
    %v780 = vsel %vm676, %v769, %v762
    %v781 = vsel %vm368, %v780, 0
    %783 = vmatpush.msra.mxu0 0.0
    %784 = vmatpush.msra.mxu0 0.0
    %785 = vmatpush.msra.mxu0 0.0
    %786 = vmatpush.msra.mxu0 0.0
    %787 = vmatpush.msra.mxu0 0.0
    %788 = vmatpush.msra.mxu0 0.0
    %789 = vmatpush.msra.mxu0 0.0
    %790 = vmatpush.msra.mxu0 0.0
    %791 = vmatpush.msra.mxu0 0.0
    %792 = vmatpush.msra.mxu0 0.0
    %793 = vmatpush.msra.mxu0 0.0
    %794 = vmatpush.msra.mxu0 0.0
    %795 = vmatpush.msra.mxu0 %v773
    %796 = vmatpush.msra.mxu0 %v772
    %797 = vmatpush.msra.mxu0 %v771
    %798 = vmatpush.msra.mxu0 %v770
    %799 = vmatmul.f32.gmra.mxu0 %v781
    %v800 = vpop.f32.mrf.mxu0
    %v801 = vadd.f32 %v776, %v800
    %802 = vdwg.mxu0
    %v803 = vld [vmem:[#allocation2 + $0x4] sm:$0xf]
    %v804 = vld [vmem:[#allocation2 + $0xc] sm:$0xf]
    %v805 = vld [vmem:[%s14] sm:$0xff]
    %v806 = vld [vmem:[%s14 + $0x8] sm:$0xff]
    %v807 = vld [vmem:[%s14 + $0x10] sm:$0xff]
    %v808 = vld [vmem:[%s14 + $0x18] sm:$0xff]
    %811 = vst [vmem:[#allocation1] ss:$2 sm:$0xff] %v803
    %s812 = scalar_lea.vmem [#allocation1], 1
    %813 = vst [vmem:[%s812] ss:$2 sm:$0xff] %v804
    %v814 = vld.sshfl [vmem:[#allocation1] sm:$0xff pattern:$0x75316420]
    %v815 = vsel %vm368, %v814, 0
    %817 = vmatpush.msra.mxu0 0.0
    %818 = vmatpush.msra.mxu0 0.0
    %819 = vmatpush.msra.mxu0 0.0
    %820 = vmatpush.msra.mxu0 0.0
    %821 = vmatpush.msra.mxu0 0.0
    %822 = vmatpush.msra.mxu0 0.0
    %823 = vmatpush.msra.mxu0 0.0
    %824 = vmatpush.msra.mxu0 0.0
    %825 = vmatpush.msra.mxu0 0.0
    %826 = vmatpush.msra.mxu0 0.0
    %827 = vmatpush.msra.mxu0 0.0
    %828 = vmatpush.msra.mxu0 0.0
    %829 = vmatpush.msra.mxu0 %v808
    %830 = vmatpush.msra.mxu0 %v807
    %831 = vmatpush.msra.mxu0 %v806
    %832 = vmatpush.msra.mxu0 %v805
    %833 = vmatmul.f32.gmra.mxu0 %v815
    %v834 = vpop.f32.mrf.mxu0
    %v835 = vadd.f32 0.0, %v834
    %836 = vdwg.mxu0
    %v838 = vrot.slane %v835, 4
    %v840 = vld [vmem:[#allocation16] sm:$0xff]
    %v841 = vld [vmem:[#allocation16 + $0x8] sm:$0xff]
    %v842 = vld [vmem:[#allocation16 + $0x10] sm:$0xff]
    %v843 = vld [vmem:[#allocation16 + $0x18] sm:$0xff]
    %844 = vst [vmem:[#allocation1] ss:$2 sm:$0xff] %v803
    %s845 = scalar_lea.vmem [#allocation1], 1
    %846 = vst [vmem:[%s845] ss:$2 sm:$0xff] %v804
    %v847 = vld.sshfl [vmem:[#allocation1] sm:$0xff pattern:$0x75316420]
    %v848 = vsel %vm368, %v847, 0
    %850 = vmatpush.msra.mxu0 0.0
    %851 = vmatpush.msra.mxu0 0.0
    %852 = vmatpush.msra.mxu0 0.0
    %853 = vmatpush.msra.mxu0 0.0
    %854 = vmatpush.msra.mxu0 0.0
    %855 = vmatpush.msra.mxu0 0.0
    %856 = vmatpush.msra.mxu0 0.0
    %857 = vmatpush.msra.mxu0 0.0
    %858 = vmatpush.msra.mxu0 0.0
    %859 = vmatpush.msra.mxu0 0.0
    %860 = vmatpush.msra.mxu0 0.0
    %861 = vmatpush.msra.mxu0 0.0
    %862 = vmatpush.msra.mxu0 %v843
    %863 = vmatpush.msra.mxu0 %v842
    %864 = vmatpush.msra.mxu0 %v841
    %865 = vmatpush.msra.mxu0 %v840
    %866 = vmatmul.f32.gmra.mxu0 %v848
    %v867 = vpop.f32.mrf.mxu0
    %v868 = vadd.f32 0.0, %v867
    %869 = vdwg.mxu0
    %v871 = vrot.slane %v868, 4
    %v873 = vld [vmem:[#allocation17] sm:$0xff]
    %v874 = vld [vmem:[#allocation17 + $0x8] sm:$0xff]
    %v875 = vld [vmem:[#allocation17 + $0x10] sm:$0xff]
    %v876 = vld [vmem:[#allocation17 + $0x18] sm:$0xff]
    %v877 = vld [vmem:[#allocation26] sm:$0x1]
    %v879 = vperm.slane %v877, 0
    %881 = vst [vmem:[#allocation1] ss:$2 sm:$0xff] %v803
    %s882 = scalar_lea.vmem [#allocation1], 1
    %883 = vst [vmem:[%s882] ss:$2 sm:$0xff] %v804
    %v884 = vld.sshfl [vmem:[#allocation1] sm:$0xff pattern:$0x75316420]
    %v885 = vsel %vm368, %v884, 0
    %887 = vmatpush.msra.mxu0 0.0
    %888 = vmatpush.msra.mxu0 0.0
    %889 = vmatpush.msra.mxu0 0.0
    %890 = vmatpush.msra.mxu0 0.0
    %891 = vmatpush.msra.mxu0 0.0
    %892 = vmatpush.msra.mxu0 0.0
    %893 = vmatpush.msra.mxu0 0.0
    %894 = vmatpush.msra.mxu0 0.0
    %895 = vmatpush.msra.mxu0 0.0
    %896 = vmatpush.msra.mxu0 0.0
    %897 = vmatpush.msra.mxu0 0.0
    %898 = vmatpush.msra.mxu0 0.0
    %899 = vmatpush.msra.mxu0 %v876
    %900 = vmatpush.msra.mxu0 %v875
    %901 = vmatpush.msra.mxu0 %v874
    %902 = vmatpush.msra.mxu0 %v873
    %903 = vmatmul.f32.gmra.mxu0 %v885
    %v904 = vpop.f32.mrf.mxu0
    %v905 = vadd.f32 %v879, %v904
    %906 = vdwg.mxu0
    %v908 = vrot.slane %v905, 4
    %v910 = vld [vmem:[#allocation23] sm:$0x1]
    %v912 = vperm.slane %v910, 0
    %v913 = vrot.slane %v912, 1
    %v916 = vadd.f32 %v835, %v912
    %v917 = vadd.f32 %v838, %v913
    %v918 = vxor.u32 %v916, 2147483648
    %v919 = vxor.u32 %v917, 2147483648
    %v920 = vmul.f32 %v918, 1.442695
    %v921 = vpow.pop %v920
    %v922 = vmul.f32 %v919, 1.442695
    %v923 = vpow.pop %v922
    %v924 = vadd.f32 %v921, 1.0
    %v925 = vadd.f32 %v923, 1.0
    %v926 = vrcp.pop %v924
    %v927 = vmul.f32 %v924, %v926
    %v928 = vsub.f32 1.0, %v927
    %v929 = vmul.f32 %v926, %v928
    %v930 = vadd.f32 %v926, %v929
    %vm931 = vweird.f32 %v924
    %vm932 = vweird.f32 %v926
    %vm933 = vmor %vm931, %vm932
    %v934 = vsel %vm933, %v926, %v930
    %v935 = vand.u32 2147483647, %v924
    %vm936 = vcmp.eq.f32.partialorder %v935, 8.507059e+37
    %v937 = vand.u32 %v924, 2147483648
    %v938 = vor.u32 1.1754944e-38, %v937
    %v939 = vsel %vm936, %v938, %v934
    %v940 = vmul.f32 1.0, %v939
    %v941 = vrcp.pop %v925
    %v942 = vmul.f32 %v925, %v941
    %v943 = vsub.f32 1.0, %v942
    %v944 = vmul.f32 %v941, %v943
    %v945 = vadd.f32 %v941, %v944
    %vm946 = vweird.f32 %v925
    %vm947 = vweird.f32 %v941
    %vm948 = vmor %vm946, %vm947
    %v949 = vsel %vm948, %v941, %v945
    %v950 = vand.u32 2147483647, %v925
    %vm951 = vcmp.eq.f32.partialorder %v950, 8.507059e+37
    %v952 = vand.u32 %v925, 2147483648
    %v953 = vor.u32 1.1754944e-38, %v952
    %v954 = vsel %vm951, %v953, %v949
    %v955 = vmul.f32 1.0, %v954
    %v956 = vld [vmem:[#allocation25] sm:$0x1]
    %v958 = vperm.slane %v956, 0
    %v959 = vrot.slane %v958, 1
    %v962 = vadd.f32 %v868, %v958
    %v963 = vadd.f32 %v871, %v959
    %v964 = vxor.u32 %v962, 2147483648
    %v965 = vxor.u32 %v963, 2147483648
    %v966 = vmul.f32 %v964, 1.442695
    %v967 = vpow.pop %v966
    %v968 = vmul.f32 %v965, 1.442695
    %v969 = vpow.pop %v968
    %v970 = vadd.f32 %v967, 1.0
    %v971 = vadd.f32 %v969, 1.0
    %v972 = vrcp.pop %v970
    %v973 = vmul.f32 %v970, %v972
    %v974 = vsub.f32 1.0, %v973
    %v975 = vmul.f32 %v972, %v974
    %v976 = vadd.f32 %v972, %v975
    %vm977 = vweird.f32 %v970
    %vm978 = vweird.f32 %v972
    %vm979 = vmor %vm977, %vm978
    %v980 = vsel %vm979, %v972, %v976
    %v981 = vand.u32 2147483647, %v970
    %vm982 = vcmp.eq.f32.partialorder %v981, 8.507059e+37
    %v983 = vand.u32 %v970, 2147483648
    %v984 = vor.u32 1.1754944e-38, %v983
    %v985 = vsel %vm982, %v984, %v980
    %v986 = vmul.f32 1.0, %v985
    %v987 = vrcp.pop %v971
    %v988 = vmul.f32 %v971, %v987
    %v989 = vsub.f32 1.0, %v988
    %v990 = vmul.f32 %v987, %v989
    %v991 = vadd.f32 %v987, %v990
    %vm992 = vweird.f32 %v971
    %vm993 = vweird.f32 %v987
    %vm994 = vmor %vm992, %vm993
    %v995 = vsel %vm994, %v987, %v991
    %v996 = vand.u32 2147483647, %v971
    %vm997 = vcmp.eq.f32.partialorder %v996, 8.507059e+37
    %v998 = vand.u32 %v971, 2147483648
    %v999 = vor.u32 1.1754944e-38, %v998
    %v1000 = vsel %vm997, %v999, %v995
    %v1001 = vmul.f32 1.0, %v1000
    %v1002 = vld [vmem:[#allocation28] sm:$0x1]
    %v1004 = vperm.slane %v1002, 0
    %v1006 = vrot.slane %v1004, 1
    %v1008 = vmul.f32 %v940, %v1004
    %v1009 = vmul.f32 %v955, %v1006
    %v1010 = vadd.f32 %v905, %v1008
    %v1011 = vadd.f32 %v908, %v1009
    %v1012 = vtanh.pop %v1010
    %v1013 = vtanh.pop %v1011
    %v1014 = vsub.f32 1.0, %v986
    %v1015 = vsub.f32 1.0, %v1001
    %v1016 = vmul.f32 %v1014, %v1012
    %v1017 = vmul.f32 %v1015, %v1013
    %v1018 = vld [vmem:[#allocation19] sm:$0xff]
    %v1019 = vld [vmem:[#allocation19 + $0x8] sm:$0xff]
    %v1020 = vld [vmem:[#allocation19 + $0x10] sm:$0xff]
    %v1021 = vld [vmem:[#allocation19 + $0x18] sm:$0xff]
    %v1024 = vperm.slane %v1016, 0
    %v1025 = vperm.slane %v1017, 0
    %v1026 = vsel %vm676, %v1025, %v1024
    %v1027 = vsel %vm368, %v1026, 0
    %1029 = vmatpush.msra.mxu0 0.0
    %1030 = vmatpush.msra.mxu0 0.0
    %1031 = vmatpush.msra.mxu0 0.0
    %1032 = vmatpush.msra.mxu0 0.0
    %1033 = vmatpush.msra.mxu0 0.0
    %1034 = vmatpush.msra.mxu0 0.0
    %1035 = vmatpush.msra.mxu0 0.0
    %1036 = vmatpush.msra.mxu0 0.0
    %1037 = vmatpush.msra.mxu0 0.0
    %1038 = vmatpush.msra.mxu0 0.0
    %1039 = vmatpush.msra.mxu0 0.0
    %1040 = vmatpush.msra.mxu0 0.0
    %1041 = vmatpush.msra.mxu0 %v1021
    %1042 = vmatpush.msra.mxu0 %v1020
    %1043 = vmatpush.msra.mxu0 %v1019
    %1044 = vmatpush.msra.mxu0 %v1018
    %1045 = vmatmul.f32.gmra.mxu0 %v1027
    %v1046 = vpop.f32.mrf.mxu0
    %v1047 = vadd.f32 0.0, %v1046
    %1048 = vdwg.mxu0
    %v1049 = vld [vmem:[#allocation20] sm:$0xff]
    %v1050 = vld [vmem:[#allocation20 + $0x8] sm:$0xff]
    %v1051 = vld [vmem:[#allocation20 + $0x10] sm:$0xff]
    %v1052 = vld [vmem:[#allocation20 + $0x18] sm:$0xff]
    %1053 = vmatpush.msra.mxu0 0.0
    %1054 = vmatpush.msra.mxu0 0.0
    %1055 = vmatpush.msra.mxu0 0.0
    %1056 = vmatpush.msra.mxu0 0.0
    %1057 = vmatpush.msra.mxu0 0.0
    %1058 = vmatpush.msra.mxu0 0.0
    %1059 = vmatpush.msra.mxu0 0.0
    %1060 = vmatpush.msra.mxu0 0.0
    %1061 = vmatpush.msra.mxu0 0.0
    %1062 = vmatpush.msra.mxu0 0.0
    %1063 = vmatpush.msra.mxu0 0.0
    %1064 = vmatpush.msra.mxu0 0.0
    %1065 = vmatpush.msra.mxu0 %v1052
    %1066 = vmatpush.msra.mxu0 %v1051
    %1067 = vmatpush.msra.mxu0 %v1050
    %1068 = vmatpush.msra.mxu0 %v1049
    %1069 = vmatmul.f32.gmra.mxu0 %v1027
    %v1070 = vpop.f32.mrf.mxu0
    %v1071 = vadd.f32 0.0, %v1070
    %1072 = vdwg.mxu0
    %v1073 = vld [vmem:[#allocation22] sm:$0xff]
    %v1074 = vld [vmem:[#allocation22 + $0x8] sm:$0xff]
    %v1075 = vld [vmem:[#allocation22 + $0x10] sm:$0xff]
    %v1076 = vld [vmem:[#allocation22 + $0x18] sm:$0xff]
    %1077 = vmatpush.msra.mxu0 0.0
    %1078 = vmatpush.msra.mxu0 0.0
    %1079 = vmatpush.msra.mxu0 0.0
    %1080 = vmatpush.msra.mxu0 0.0
    %1081 = vmatpush.msra.mxu0 0.0
    %1082 = vmatpush.msra.mxu0 0.0
    %1083 = vmatpush.msra.mxu0 0.0
    %1084 = vmatpush.msra.mxu0 0.0
    %1085 = vmatpush.msra.mxu0 0.0
    %1086 = vmatpush.msra.mxu0 0.0
    %1087 = vmatpush.msra.mxu0 0.0
    %1088 = vmatpush.msra.mxu0 0.0
    %1089 = vmatpush.msra.mxu0 %v1076
    %1090 = vmatpush.msra.mxu0 %v1075
    %1091 = vmatpush.msra.mxu0 %v1074
    %1092 = vmatpush.msra.mxu0 %v1073
    %1093 = vmatmul.f32.gmra.mxu0 %v1027
    %v1094 = vpop.f32.mrf.mxu0
    %v1095 = vadd.f32 %v1004, %v1094
    %1096 = vdwg.mxu0
    %v1098 = vrot.slane %v1047, 7
    %v1101 = vadd.f32 %v835, %v1098
    %v1102 = vadd.f32 %v838, %v1047
    %v1103 = vrot.slane %v912, 7
    %v1105 = vadd.f32 %v1101, %v1103
    %v1106 = vadd.f32 %v1102, %v912
    %v1107 = vxor.u32 %v1105, 2147483648
    %v1108 = vxor.u32 %v1106, 2147483648
    %v1109 = vmul.f32 %v1107, 1.442695
    %v1110 = vpow.pop %v1109
    %v1111 = vmul.f32 %v1108, 1.442695
    %v1112 = vpow.pop %v1111
    %v1113 = vadd.f32 %v1110, 1.0
    %v1114 = vadd.f32 %v1112, 1.0
    %v1115 = vrcp.pop %v1113
    %v1116 = vmul.f32 %v1113, %v1115
    %v1117 = vsub.f32 1.0, %v1116
    %v1118 = vmul.f32 %v1115, %v1117
    %v1119 = vadd.f32 %v1115, %v1118
    %vm1120 = vweird.f32 %v1113
    %vm1121 = vweird.f32 %v1115
    %vm1122 = vmor %vm1120, %vm1121
    %v1123 = vsel %vm1122, %v1115, %v1119
    %v1124 = vand.u32 2147483647, %v1113
    %vm1125 = vcmp.eq.f32.partialorder %v1124, 8.507059e+37
    %v1126 = vand.u32 %v1113, 2147483648
    %v1127 = vor.u32 1.1754944e-38, %v1126
    %v1128 = vsel %vm1125, %v1127, %v1123
    %v1129 = vmul.f32 1.0, %v1128
    %v1130 = vrcp.pop %v1114
    %v1131 = vmul.f32 %v1114, %v1130
    %v1132 = vsub.f32 1.0, %v1131
    %v1133 = vmul.f32 %v1130, %v1132
    %v1134 = vadd.f32 %v1130, %v1133
    %vm1135 = vweird.f32 %v1114
    %vm1136 = vweird.f32 %v1130
    %vm1137 = vmor %vm1135, %vm1136
    %v1138 = vsel %vm1137, %v1130, %v1134
    %v1139 = vand.u32 2147483647, %v1114
    %vm1140 = vcmp.eq.f32.partialorder %v1139, 8.507059e+37
    %v1141 = vand.u32 %v1114, 2147483648
    %v1142 = vor.u32 1.1754944e-38, %v1141
    %v1143 = vsel %vm1140, %v1142, %v1138
    %v1144 = vmul.f32 1.0, %v1143
    %v1146 = vrot.slane %v1071, 7
    %v1149 = vadd.f32 %v868, %v1146
    %v1150 = vadd.f32 %v871, %v1071
    %v1151 = vrot.slane %v958, 7
    %v1153 = vadd.f32 %v1149, %v1151
    %v1154 = vadd.f32 %v1150, %v958
    %v1155 = vxor.u32 %v1153, 2147483648
    %v1156 = vxor.u32 %v1154, 2147483648
    %v1157 = vmul.f32 %v1155, 1.442695
    %v1158 = vpow.pop %v1157
    %v1159 = vmul.f32 %v1156, 1.442695
    %v1160 = vpow.pop %v1159
    %v1161 = vadd.f32 %v1158, 1.0
    %v1162 = vadd.f32 %v1160, 1.0
    %v1163 = vrcp.pop %v1161
    %v1164 = vmul.f32 %v1161, %v1163
    %v1165 = vsub.f32 1.0, %v1164
    %v1166 = vmul.f32 %v1163, %v1165
    %v1167 = vadd.f32 %v1163, %v1166
    %vm1168 = vweird.f32 %v1161
    %vm1169 = vweird.f32 %v1163
    %vm1170 = vmor %vm1168, %vm1169
    %v1171 = vsel %vm1170, %v1163, %v1167
    %v1172 = vand.u32 2147483647, %v1161
    %vm1173 = vcmp.eq.f32.partialorder %v1172, 8.507059e+37
    %v1174 = vand.u32 %v1161, 2147483648
    %v1175 = vor.u32 1.1754944e-38, %v1174
    %v1176 = vsel %vm1173, %v1175, %v1171
    %v1177 = vmul.f32 1.0, %v1176
    %v1178 = vrcp.pop %v1162
    %v1179 = vmul.f32 %v1162, %v1178
    %v1180 = vsub.f32 1.0, %v1179
    %v1181 = vmul.f32 %v1178, %v1180
    %v1182 = vadd.f32 %v1178, %v1181
    %vm1183 = vweird.f32 %v1162
    %vm1184 = vweird.f32 %v1178
    %vm1185 = vmor %vm1183, %vm1184
    %v1186 = vsel %vm1185, %v1178, %v1182
    %v1187 = vand.u32 2147483647, %v1162
    %vm1188 = vcmp.eq.f32.partialorder %v1187, 8.507059e+37
    %v1189 = vand.u32 %v1162, 2147483648
    %v1190 = vor.u32 1.1754944e-38, %v1189
    %v1191 = vsel %vm1188, %v1190, %v1186
    %v1192 = vmul.f32 1.0, %v1191
    %v1194 = vrot.slane %v1095, 7
    %v1197 = vmul.f32 %v1129, %v1194
    %v1198 = vmul.f32 %v1144, %v1095
    %v1199 = vadd.f32 %v905, %v1197
    %v1200 = vadd.f32 %v908, %v1198
    %v1201 = vtanh.pop %v1199
    %v1202 = vtanh.pop %v1200
    %v1203 = vsub.f32 1.0, %v1177
    %v1204 = vsub.f32 1.0, %v1192
    %v1205 = vmul.f32 %v1203, %v1201
    %v1206 = vmul.f32 %v1204, %v1202
    %v1207 = vrot.slane %v1016, 7
    %v1208 = vrot.slane %v1017, 7
    %v1211 = vmul.f32 %v1177, %v1207
    %v1212 = vmul.f32 %v1192, %v1208
    %v1213 = vadd.f32 %v1205, %v1211
    %v1214 = vadd.f32 %v1206, %v1212
    %v1217 = vperm.slane %v1213, 1
    %v1218 = vperm.slane %v1214, 1
    %v1219 = vsel %vm676, %v1218, %v1217
    %v1220 = vsel %vm368, %v1219, 0
    %1222 = vmatpush.msra.mxu0 0.0
    %1223 = vmatpush.msra.mxu0 0.0
    %1224 = vmatpush.msra.mxu0 0.0
    %1225 = vmatpush.msra.mxu0 0.0
    %1226 = vmatpush.msra.mxu0 0.0
    %1227 = vmatpush.msra.mxu0 0.0
    %1228 = vmatpush.msra.mxu0 0.0
    %1229 = vmatpush.msra.mxu0 0.0
    %1230 = vmatpush.msra.mxu0 0.0
    %1231 = vmatpush.msra.mxu0 0.0
    %1232 = vmatpush.msra.mxu0 0.0
    %1233 = vmatpush.msra.mxu0 0.0
    %1234 = vmatpush.msra.mxu0 %v1021
    %1235 = vmatpush.msra.mxu0 %v1020
    %1236 = vmatpush.msra.mxu0 %v1019
    %1237 = vmatpush.msra.mxu0 %v1018
    %1238 = vmatmul.f32.gmra.mxu0 %v1220
    %v1239 = vpop.f32.mrf.mxu0
    %v1240 = vadd.f32 0.0, %v1239
    %1241 = vdwg.mxu0
    %1242 = vmatpush.msra.mxu0 0.0
    %1243 = vmatpush.msra.mxu0 0.0
    %1244 = vmatpush.msra.mxu0 0.0
    %1245 = vmatpush.msra.mxu0 0.0
    %1246 = vmatpush.msra.mxu0 0.0
    %1247 = vmatpush.msra.mxu0 0.0
    %1248 = vmatpush.msra.mxu0 0.0
    %1249 = vmatpush.msra.mxu0 0.0
    %1250 = vmatpush.msra.mxu0 0.0
    %1251 = vmatpush.msra.mxu0 0.0
    %1252 = vmatpush.msra.mxu0 0.0
    %1253 = vmatpush.msra.mxu0 0.0
    %1254 = vmatpush.msra.mxu0 %v1052
    %1255 = vmatpush.msra.mxu0 %v1051
    %1256 = vmatpush.msra.mxu0 %v1050
    %1257 = vmatpush.msra.mxu0 %v1049
    %1258 = vmatmul.f32.gmra.mxu0 %v1220
    %v1259 = vpop.f32.mrf.mxu0
    %v1260 = vadd.f32 0.0, %v1259
    %1261 = vdwg.mxu0
    %1262 = vmatpush.msra.mxu0 0.0
    %1263 = vmatpush.msra.mxu0 0.0
    %1264 = vmatpush.msra.mxu0 0.0
    %1265 = vmatpush.msra.mxu0 0.0
    %1266 = vmatpush.msra.mxu0 0.0
    %1267 = vmatpush.msra.mxu0 0.0
    %1268 = vmatpush.msra.mxu0 0.0
    %1269 = vmatpush.msra.mxu0 0.0
    %1270 = vmatpush.msra.mxu0 0.0
    %1271 = vmatpush.msra.mxu0 0.0
    %1272 = vmatpush.msra.mxu0 0.0
    %1273 = vmatpush.msra.mxu0 0.0
    %1274 = vmatpush.msra.mxu0 %v1076
    %1275 = vmatpush.msra.mxu0 %v1075
    %1276 = vmatpush.msra.mxu0 %v1074
    %1277 = vmatpush.msra.mxu0 %v1073
    %1278 = vmatmul.f32.gmra.mxu0 %v1220
    %v1279 = vpop.f32.mrf.mxu0
    %v1280 = vadd.f32 %v1004, %v1279
    %1281 = vdwg.mxu0
    %v1283 = vrot.slane %v1240, 6
    %v1284 = vrot.slane %v1240, 7
    %v1287 = vadd.f32 %v835, %v1283
    %v1288 = vadd.f32 %v838, %v1284
    %v1289 = vrot.slane %v912, 6
    %v1291 = vadd.f32 %v1287, %v1289
    %v1292 = vadd.f32 %v1288, %v1103
    %v1293 = vxor.u32 %v1291, 2147483648
    %v1294 = vxor.u32 %v1292, 2147483648
    %v1295 = vmul.f32 %v1293, 1.442695
    %v1296 = vpow.pop %v1295
    %v1297 = vmul.f32 %v1294, 1.442695
    %v1298 = vpow.pop %v1297
    %v1299 = vadd.f32 %v1296, 1.0
    %v1300 = vadd.f32 %v1298, 1.0
    %v1301 = vrcp.pop %v1299
    %v1302 = vmul.f32 %v1299, %v1301
    %v1303 = vsub.f32 1.0, %v1302
    %v1304 = vmul.f32 %v1301, %v1303
    %v1305 = vadd.f32 %v1301, %v1304
    %vm1306 = vweird.f32 %v1299
    %vm1307 = vweird.f32 %v1301
    %vm1308 = vmor %vm1306, %vm1307
    %v1309 = vsel %vm1308, %v1301, %v1305
    %v1310 = vand.u32 2147483647, %v1299
    %vm1311 = vcmp.eq.f32.partialorder %v1310, 8.507059e+37
    %v1312 = vand.u32 %v1299, 2147483648
    %v1313 = vor.u32 1.1754944e-38, %v1312
    %v1314 = vsel %vm1311, %v1313, %v1309
    %v1315 = vmul.f32 1.0, %v1314
    %v1316 = vrcp.pop %v1300
    %v1317 = vmul.f32 %v1300, %v1316
    %v1318 = vsub.f32 1.0, %v1317
    %v1319 = vmul.f32 %v1316, %v1318
    %v1320 = vadd.f32 %v1316, %v1319
    %vm1321 = vweird.f32 %v1300
    %vm1322 = vweird.f32 %v1316
    %vm1323 = vmor %vm1321, %vm1322
    %v1324 = vsel %vm1323, %v1316, %v1320
    %v1325 = vand.u32 2147483647, %v1300
    %vm1326 = vcmp.eq.f32.partialorder %v1325, 8.507059e+37
    %v1327 = vand.u32 %v1300, 2147483648
    %v1328 = vor.u32 1.1754944e-38, %v1327
    %v1329 = vsel %vm1326, %v1328, %v1324
    %v1330 = vmul.f32 1.0, %v1329
    %v1332 = vrot.slane %v1260, 6
    %v1333 = vrot.slane %v1260, 7
    %v1336 = vadd.f32 %v868, %v1332
    %v1337 = vadd.f32 %v871, %v1333
    %v1338 = vrot.slane %v958, 6
    %v1340 = vadd.f32 %v1336, %v1338
    %v1341 = vadd.f32 %v1337, %v1151
    %v1342 = vxor.u32 %v1340, 2147483648
    %v1343 = vxor.u32 %v1341, 2147483648
    %v1344 = vmul.f32 %v1342, 1.442695
    %v1345 = vpow.pop %v1344
    %v1346 = vmul.f32 %v1343, 1.442695
    %v1347 = vpow.pop %v1346
    %v1348 = vadd.f32 %v1345, 1.0
    %v1349 = vadd.f32 %v1347, 1.0
    %v1350 = vrcp.pop %v1348
    %v1351 = vmul.f32 %v1348, %v1350
    %v1352 = vsub.f32 1.0, %v1351
    %v1353 = vmul.f32 %v1350, %v1352
    %v1354 = vadd.f32 %v1350, %v1353
    %vm1355 = vweird.f32 %v1348
    %vm1356 = vweird.f32 %v1350
    %vm1357 = vmor %vm1355, %vm1356
    %v1358 = vsel %vm1357, %v1350, %v1354
    %v1359 = vand.u32 2147483647, %v1348
    %vm1360 = vcmp.eq.f32.partialorder %v1359, 8.507059e+37
    %v1361 = vand.u32 %v1348, 2147483648
    %v1362 = vor.u32 1.1754944e-38, %v1361
    %v1363 = vsel %vm1360, %v1362, %v1358
    %v1364 = vmul.f32 1.0, %v1363
    %v1365 = vrcp.pop %v1349
    %v1366 = vmul.f32 %v1349, %v1365
    %v1367 = vsub.f32 1.0, %v1366
    %v1368 = vmul.f32 %v1365, %v1367
    %v1369 = vadd.f32 %v1365, %v1368
    %vm1370 = vweird.f32 %v1349
    %vm1371 = vweird.f32 %v1365
    %vm1372 = vmor %vm1370, %vm1371
    %v1373 = vsel %vm1372, %v1365, %v1369
    %v1374 = vand.u32 2147483647, %v1349
    %vm1375 = vcmp.eq.f32.partialorder %v1374, 8.507059e+37
    %v1376 = vand.u32 %v1349, 2147483648
    %v1377 = vor.u32 1.1754944e-38, %v1376
    %v1378 = vsel %vm1375, %v1377, %v1373
    %v1379 = vmul.f32 1.0, %v1378
    %v1381 = vrot.slane %v1280, 6
    %v1382 = vrot.slane %v1280, 7
    %v1385 = vmul.f32 %v1315, %v1381
    %v1386 = vmul.f32 %v1330, %v1382
    %v1387 = vadd.f32 %v905, %v1385
    %v1388 = vadd.f32 %v908, %v1386
    %v1389 = vtanh.pop %v1387
    %v1390 = vtanh.pop %v1388
    %v1391 = vsub.f32 1.0, %v1364
    %v1392 = vsub.f32 1.0, %v1379
    %v1393 = vmul.f32 %v1391, %v1389
    %v1394 = vmul.f32 %v1392, %v1390
    %v1395 = vrot.slane %v1213, 7
    %v1396 = vrot.slane %v1214, 7
    %v1399 = vmul.f32 %v1364, %v1395
    %v1400 = vmul.f32 %v1379, %v1396
    %v1401 = vadd.f32 %v1393, %v1399
    %v1402 = vadd.f32 %v1394, %v1400
    %v1405 = vperm.slane %v1401, 2
    %v1406 = vperm.slane %v1402, 2
    %v1407 = vsel %vm676, %v1406, %v1405
    %v1408 = vsel %vm368, %v1407, 0
    %1410 = vmatpush.msra.mxu0 0.0
    %1411 = vmatpush.msra.mxu0 0.0
    %1412 = vmatpush.msra.mxu0 0.0
    %1413 = vmatpush.msra.mxu0 0.0
    %1414 = vmatpush.msra.mxu0 0.0
    %1415 = vmatpush.msra.mxu0 0.0
    %1416 = vmatpush.msra.mxu0 0.0
    %1417 = vmatpush.msra.mxu0 0.0
    %1418 = vmatpush.msra.mxu0 0.0
    %1419 = vmatpush.msra.mxu0 0.0
    %1420 = vmatpush.msra.mxu0 0.0
    %1421 = vmatpush.msra.mxu0 0.0
    %1422 = vmatpush.msra.mxu0 %v1021
    %1423 = vmatpush.msra.mxu0 %v1020
    %1424 = vmatpush.msra.mxu0 %v1019
    %1425 = vmatpush.msra.mxu0 %v1018
    %1426 = vmatmul.f32.gmra.mxu0 %v1408
    %v1427 = vpop.f32.mrf.mxu0
    %v1428 = vadd.f32 0.0, %v1427
    %1429 = vdwg.mxu0
    %1430 = vmatpush.msra.mxu0 0.0
    %1431 = vmatpush.msra.mxu0 0.0
    %1432 = vmatpush.msra.mxu0 0.0
    %1433 = vmatpush.msra.mxu0 0.0
    %1434 = vmatpush.msra.mxu0 0.0
    %1435 = vmatpush.msra.mxu0 0.0
    %1436 = vmatpush.msra.mxu0 0.0
    %1437 = vmatpush.msra.mxu0 0.0
    %1438 = vmatpush.msra.mxu0 0.0
    %1439 = vmatpush.msra.mxu0 0.0
    %1440 = vmatpush.msra.mxu0 0.0
    %1441 = vmatpush.msra.mxu0 0.0
    %1442 = vmatpush.msra.mxu0 %v1052
    %1443 = vmatpush.msra.mxu0 %v1051
    %1444 = vmatpush.msra.mxu0 %v1050
    %1445 = vmatpush.msra.mxu0 %v1049
    %1446 = vmatmul.f32.gmra.mxu0 %v1408
    %v1447 = vpop.f32.mrf.mxu0
    %v1448 = vadd.f32 0.0, %v1447
    %1449 = vdwg.mxu0
    %1450 = vmatpush.msra.mxu0 0.0
    %1451 = vmatpush.msra.mxu0 0.0
    %1452 = vmatpush.msra.mxu0 0.0
    %1453 = vmatpush.msra.mxu0 0.0
    %1454 = vmatpush.msra.mxu0 0.0
    %1455 = vmatpush.msra.mxu0 0.0
    %1456 = vmatpush.msra.mxu0 0.0
    %1457 = vmatpush.msra.mxu0 0.0
    %1458 = vmatpush.msra.mxu0 0.0
    %1459 = vmatpush.msra.mxu0 0.0
    %1460 = vmatpush.msra.mxu0 0.0
    %1461 = vmatpush.msra.mxu0 0.0
    %1462 = vmatpush.msra.mxu0 %v1076
    %1463 = vmatpush.msra.mxu0 %v1075
    %1464 = vmatpush.msra.mxu0 %v1074
    %1465 = vmatpush.msra.mxu0 %v1073
    %1466 = vmatmul.f32.gmra.mxu0 %v1408
    %v1467 = vpop.f32.mrf.mxu0
    %v1468 = vadd.f32 %v1004, %v1467
    %1469 = vdwg.mxu0
    %v1471 = vrot.slane %v1428, 5
    %v1472 = vrot.slane %v1428, 6
    %v1475 = vadd.f32 %v835, %v1471
    %v1476 = vadd.f32 %v838, %v1472
    %v1477 = vrot.slane %v912, 5
    %v1479 = vadd.f32 %v1475, %v1477
    %v1480 = vadd.f32 %v1476, %v1289
    %v1481 = vxor.u32 %v1479, 2147483648
    %v1482 = vxor.u32 %v1480, 2147483648
    %v1483 = vmul.f32 %v1481, 1.442695
    %v1484 = vpow.pop %v1483
    %v1485 = vmul.f32 %v1482, 1.442695
    %v1486 = vpow.pop %v1485
    %v1487 = vadd.f32 %v1484, 1.0
    %v1488 = vadd.f32 %v1486, 1.0
    %v1489 = vrcp.pop %v1487
    %v1490 = vmul.f32 %v1487, %v1489
    %v1491 = vsub.f32 1.0, %v1490
    %v1492 = vmul.f32 %v1489, %v1491
    %v1493 = vadd.f32 %v1489, %v1492
    %vm1494 = vweird.f32 %v1487
    %vm1495 = vweird.f32 %v1489
    %vm1496 = vmor %vm1494, %vm1495
    %v1497 = vsel %vm1496, %v1489, %v1493
    %v1498 = vand.u32 2147483647, %v1487
    %vm1499 = vcmp.eq.f32.partialorder %v1498, 8.507059e+37
    %v1500 = vand.u32 %v1487, 2147483648
    %v1501 = vor.u32 1.1754944e-38, %v1500
    %v1502 = vsel %vm1499, %v1501, %v1497
    %v1503 = vmul.f32 1.0, %v1502
    %v1504 = vrcp.pop %v1488
    %v1505 = vmul.f32 %v1488, %v1504
    %v1506 = vsub.f32 1.0, %v1505
    %v1507 = vmul.f32 %v1504, %v1506
    %v1508 = vadd.f32 %v1504, %v1507
    %vm1509 = vweird.f32 %v1488
    %vm1510 = vweird.f32 %v1504
    %vm1511 = vmor %vm1509, %vm1510
    %v1512 = vsel %vm1511, %v1504, %v1508
    %v1513 = vand.u32 2147483647, %v1488
    %vm1514 = vcmp.eq.f32.partialorder %v1513, 8.507059e+37
    %v1515 = vand.u32 %v1488, 2147483648
    %v1516 = vor.u32 1.1754944e-38, %v1515
    %v1517 = vsel %vm1514, %v1516, %v1512
    %v1518 = vmul.f32 1.0, %v1517
    %v1520 = vrot.slane %v1448, 5
    %v1521 = vrot.slane %v1448, 6
    %v1524 = vadd.f32 %v868, %v1520
    %v1525 = vadd.f32 %v871, %v1521
    %v1526 = vrot.slane %v958, 5
    %v1528 = vadd.f32 %v1524, %v1526
    %v1529 = vadd.f32 %v1525, %v1338
    %v1530 = vxor.u32 %v1528, 2147483648
    %v1531 = vxor.u32 %v1529, 2147483648
    %v1532 = vmul.f32 %v1530, 1.442695
    %v1533 = vpow.pop %v1532
    %v1534 = vmul.f32 %v1531, 1.442695
    %v1535 = vpow.pop %v1534
    %v1536 = vadd.f32 %v1533, 1.0
    %v1537 = vadd.f32 %v1535, 1.0
    %v1538 = vrcp.pop %v1536
    %v1539 = vmul.f32 %v1536, %v1538
    %v1540 = vsub.f32 1.0, %v1539
    %v1541 = vmul.f32 %v1538, %v1540
    %v1542 = vadd.f32 %v1538, %v1541
    %vm1543 = vweird.f32 %v1536
    %vm1544 = vweird.f32 %v1538
    %vm1545 = vmor %vm1543, %vm1544
    %v1546 = vsel %vm1545, %v1538, %v1542
    %v1547 = vand.u32 2147483647, %v1536
    %vm1548 = vcmp.eq.f32.partialorder %v1547, 8.507059e+37
    %v1549 = vand.u32 %v1536, 2147483648
    %v1550 = vor.u32 1.1754944e-38, %v1549
    %v1551 = vsel %vm1548, %v1550, %v1546
    %v1552 = vmul.f32 1.0, %v1551
    %v1553 = vrcp.pop %v1537
    %v1554 = vmul.f32 %v1537, %v1553
    %v1555 = vsub.f32 1.0, %v1554
    %v1556 = vmul.f32 %v1553, %v1555
    %v1557 = vadd.f32 %v1553, %v1556
    %vm1558 = vweird.f32 %v1537
    %vm1559 = vweird.f32 %v1553
    %vm1560 = vmor %vm1558, %vm1559
    %v1561 = vsel %vm1560, %v1553, %v1557
    %v1562 = vand.u32 2147483647, %v1537
    %vm1563 = vcmp.eq.f32.partialorder %v1562, 8.507059e+37
    %v1564 = vand.u32 %v1537, 2147483648
    %v1565 = vor.u32 1.1754944e-38, %v1564
    %v1566 = vsel %vm1563, %v1565, %v1561
    %v1567 = vmul.f32 1.0, %v1566
    %v1569 = vrot.slane %v1468, 5
    %v1570 = vrot.slane %v1468, 6
    %v1573 = vmul.f32 %v1503, %v1569
    %v1574 = vmul.f32 %v1518, %v1570
    %v1575 = vadd.f32 %v905, %v1573
    %v1576 = vadd.f32 %v908, %v1574
    %v1577 = vtanh.pop %v1575
    %v1578 = vtanh.pop %v1576
    %v1579 = vsub.f32 1.0, %v1552
    %v1580 = vsub.f32 1.0, %v1567
    %v1581 = vmul.f32 %v1579, %v1577
    %v1582 = vmul.f32 %v1580, %v1578
    %v1583 = vrot.slane %v1401, 7
    %v1584 = vrot.slane %v1402, 7
    %v1587 = vmul.f32 %v1552, %v1583
    %v1588 = vmul.f32 %v1567, %v1584
    %v1589 = vadd.f32 %v1581, %v1587
    %v1590 = vadd.f32 %v1582, %v1588
    %v1591 = vld [vmem:[%s24] sm:$0xff]
    %v1592 = vld [vmem:[%s24 + $0x8] sm:$0xff]
    %v1593 = vld [vmem:[%s24 + $0x10] sm:$0xff]
    %v1594 = vld [vmem:[%s24 + $0x18] sm:$0xff]
    %v1595 = vld [vmem:[#allocation29] sm:$0x1]
    %v1597 = vperm.slane %v1595, 0
    %v1601 = vperm.slane %v1589, 3
    %v1602 = vperm.slane %v1590, 3
    %v1603 = vsel %vm676, %v1602, %v1601
    %v1604 = vsel %vm368, %v1603, 0
    %1606 = vmatpush.msra.mxu0 0.0
    %1607 = vmatpush.msra.mxu0 0.0
    %1608 = vmatpush.msra.mxu0 0.0
    %1609 = vmatpush.msra.mxu0 0.0
    %1610 = vmatpush.msra.mxu0 0.0
    %1611 = vmatpush.msra.mxu0 0.0
    %1612 = vmatpush.msra.mxu0 0.0
    %1613 = vmatpush.msra.mxu0 0.0
    %1614 = vmatpush.msra.mxu0 0.0
    %1615 = vmatpush.msra.mxu0 0.0
    %1616 = vmatpush.msra.mxu0 0.0
    %1617 = vmatpush.msra.mxu0 0.0
    %1618 = vmatpush.msra.mxu0 %v1594
    %1619 = vmatpush.msra.mxu0 %v1593
    %1620 = vmatpush.msra.mxu0 %v1592
    %1621 = vmatpush.msra.mxu0 %v1591
    %1622 = vmatmul.f32.gmra.mxu0 %v1604
    %v1623 = vpop.f32.mrf.mxu0
    %v1624 = vadd.f32 %v1597, %v1623
    %1625 = vdwg.mxu0
    %v1626 = vtanh.pop %v1624
    %v1628 = vsel %vm368, %v801, 0
    %1630 = vmatpush.msra.mxu0 0.0
    %1631 = vmatpush.msra.mxu0 0.0
    %1632 = vmatpush.msra.mxu0 0.0
    %1633 = vmatpush.msra.mxu0 0.0
    %1634 = vmatpush.msra.mxu0 0.0
    %1635 = vmatpush.msra.mxu0 0.0
    %1636 = vmatpush.msra.mxu0 0.0
    %1637 = vmatpush.msra.mxu0 0.0
    %1638 = vmatpush.msra.mxu0 0.0
    %1639 = vmatpush.msra.mxu0 0.0
    %1640 = vmatpush.msra.mxu0 0.0
    %1641 = vmatpush.msra.mxu0 0.0
    %1642 = vmatpush.msra.mxu0 %v1594
    %1643 = vmatpush.msra.mxu0 %v1593
    %1644 = vmatpush.msra.mxu0 %v1592
    %1645 = vmatpush.msra.mxu0 %v1591
    %1646 = vmatmul.f32.gmra.mxu0 %v1628
    %v1647 = vpop.f32.mrf.mxu0
    %v1648 = vadd.f32 %v1597, %v1647
    %1649 = vdwg.mxu0
    %v1650 = vtanh.pop %v1648
    %v1651 = vld [vmem:[#allocation31] sm:$0x1]
    %v1653 = vperm.slane %v1651, 0
    %v1655 = vmul.f32 %v1626, %v1653
    %vm1656 = vcmask 123904
    %v1657 = vsel %vm1656, %v1655, 0.0
    %1658 = vadd.xlane.f32.xlu0 %v1657
    %v1659 = vpop.xlane.xlu0 %1658
    %v1660 = vmul.f32 %v1650, %v1653
    %v1661 = vsel %vm1656, %v1660, 0.0
    %1662 = vadd.xlane.f32.xlu0 %v1661
    %v1663 = vpop.xlane.xlu0 %1662
    %v1664 = vmax.f32 %v1659, %v1663
    %v1665 = vsub.f32 %v1659, %v1664
    %v1666 = vmul.f32 %v1665, 1.442695
    %v1667 = vpow.pop %v1666
    %v1668 = vsub.f32 %v1663, %v1664
    %v1669 = vmul.f32 %v1668, 1.442695
    %v1670 = vpow.pop %v1669
    %v1672 = vmul.f32 %v1667, %v1603
    %v1673 = vmul.f32 %v1670, %v801
    %v1674 = vadd.f32 %v1672, %v1673
    %v1675 = vadd.f32 %v1667, %v1670
    %v1676 = vrcp.pop %v1675
    %v1677 = vmul.f32 %v1675, %v1676
    %v1678 = vsub.f32 1.0, %v1677
    %v1679 = vmul.f32 %v1676, %v1678
    %v1680 = vadd.f32 %v1676, %v1679
    %vm1681 = vweird.f32 %v1675
    %vm1682 = vweird.f32 %v1676
    %vm1683 = vmor %vm1681, %vm1682
    %v1684 = vsel %vm1683, %v1676, %v1680
    %v1685 = vand.u32 2147483647, %v1675
    %vm1686 = vcmp.eq.f32.partialorder %v1685, 8.507059e+37
    %v1687 = vand.u32 %v1675, 2147483648
    %v1688 = vor.u32 1.1754944e-38, %v1687
    %v1689 = vsel %vm1686, %v1688, %v1684
    %v1690 = vmul.f32 %v1674, %v1689
    %vm1691 = vcmask 254976
    %1692 = vst.msk [vmem:[#allocation32] sm:$0x3] %vm1691, %v1690
    // Predicated region
    $region186: #{user_encoder_forward.1} parent=1 // pred_check
      _
    $region187: #{user_encoder_forward.1} parent=1 // pred_check_branch
      %1694 = sbr.rel (0) target = $region189
    $region188: #{user_encoder_forward.1} parent=1 // pred_region
      %1696 = vsyncadd [#allocation4], 0
      %s1698 = sshll.u32 [#allocation32], 4
      %s1699 = int_to_ptr.vmem [resolvable:$true] %s1698
      %s1700 = sshll.u32 %s27, 4
      %s1701 = int_to_ptr.hbm [resolvable:$true] %s1700
      %1703 = dma.vmem_to_hbm [thread:$0]  %s1699, 32, %s1701, [#allocation4]
    $region189: #{user_encoder_forward.1} parent=1 // pred_fallthru
      _
    // Predicated region
    $region190: #{user_encoder_forward.1} parent=1 // pred_check
      _
    $region191: #{user_encoder_forward.1} parent=1 // pred_check_branch
      %1705 = sbr.rel (0) target = $region193
    $region192: #{user_encoder_forward.1} parent=1 // pred_region
      %1707 = dma.done [#allocation4], 32
    $region193: #{user_encoder_forward.1} parent=1 // pred_fallthru
      _
    %1708 = vsyncpa [#allocation3], 1
    %1709 = vsyncpa [#allocation6], 1
    %1710 = vsyncpa [#allocation9], 1
    %1711 = vsyncpa [#allocation12], 1
    %1712 = vsyncpa [#allocation15], 1
    %1713 = vsyncpa [#allocation18], 1
    %1714 = vsyncpa [#allocation21], 1
    %1715 = vsyncpa [#allocation24], 1
    %1716 = vsyncpa [#allocation27], 1
    %1717 = vsyncpa [#allocation30], 1
    %1718 = vsyncpa [#allocation4], 1

</llo_original>
